<compile_context>
chip_gen: v6e
topology: v6e:2x2x1
jax: 0.10.0
libtpu: 0.0.40
codegen_flags: <defaults>
</compile_context>

<pallas_src>
import numpy as np
import jax
import jax.numpy as jnp
from jax.experimental import pallas as pl
from jax.experimental.pallas import tpu as pltpu


# ----------------------------------------------------------------------------
# Fused Pallas kernel: stub patch-conv (flows_low) + composed bilinear resize
# ----------------------------------------------------------------------------
def _flow_extract_kernel(src_idx_ref, tgt_idx_ref,      # scalar-prefetch refs (used in index_maps only)
                         xs_ref, xt_ref,                # (1, H, W*3) source / target frame
                         rs_ref, rt_ref,                # (W*3, 8*2*wp) weighted unfold (stage 1)
                         lsel_ref,                      # (8, hp, H)    0/1 row-selection (stage 2)
                         bias_ref,                      # (1, 2*wp)     f32 stub-conv bias
                         wwb_ref,                       # (2*wp, 2*128) blockdiag(ww_fused_t, ww_fused_t)
                         wh_ref,                        # (128, hp)     wh_fused
                         o_ref):                        # (1, 2, 128, 128)
    del src_idx_ref, tgt_idx_ref
    cdt = rs_ref.dtype                                  # compute dtype (f32, or bf16 on v6e/v7x)
    out_hw, hp = wh_ref.shape
    two_wp = wwb_ref.shape[0]

    # --- stub RAFT patch conv: flows_low for both planes, columns ordered (co, j) ---
    xs = xs_ref[0].astype(cdt)                          # (H, W*3)
    xt = xt_ref[0].astype(cdt)
    a = (jnp.dot(xs, rs_ref[...], preferred_element_type=jnp.float32) +
         jnp.dot(xt, rt_ref[...], preferred_element_type=jnp.float32))   # (H, 8*2*wp), f32

    acc = jnp.zeros((hp, two_wp), jnp.float32)
    # 8 tiny MXU ops; static unroll keeps only `acc` plus one (H, 2*wp) slice live,
    # so vreg pressure stays bounded (no need for fori_loop here).
    for py in range(8):
        a_py = a[:, py * two_wp:(py + 1) * two_wp].astype(cdt)            # (H, 2*wp)
        acc = acc + jnp.dot(lsel_ref[py], a_py, preferred_element_type=jnp.float32)
    acc = acc + bias_ref[...]                                             # (hp, 2*wp), f32

    # --- fused (8 * upflow8) -> interpolate(128,128) -> /8 :  out = wh @ fl @ ww^T ---
    # Block-diagonal ww resizes both flow planes with a single lane-dense matmul pair.
    t = jnp.dot(acc.astype(cdt), wwb_ref[...], preferred_element_type=jnp.float32)   # (hp, 2*128)
    r = jnp.dot(wh_ref[...], t.astype(cdt), preferred_element_type=jnp.float32)      # (128, 2*128)
    o_ref[0, 0] = r[:, :out_hw].astype(o_ref.dtype)     # plane u, full (128,128) tile store
    o_ref[0, 1] = r[:, out_hw:].astype(o_ref.dtype)     # plane v


# ----------------------------------------------------------------------------
# Wrapper around pallas_call
# ----------------------------------------------------------------------------
def flow_extract_forward(images, source_img_inds, target_img_inds, consts):
    """images: (N, H, W, 3) NHWC  ->  flows: (B, 2, 128, 128) with B = #pairs."""
    N, H, W, C = images.shape
    assert C == 3 and H % 8 == 0 and W % 8 == 0
    hp, wp = H // 8, W // 8
    B = source_img_inds.shape[0]
    out_hw = consts["wh_fused"].shape[0]
    ncol = consts["rs"].shape[1]                        # 8 * 2 * wp

    imgs_flat = images.reshape(N, H, W * C)             # row-major -> bitcast, no HBM copy
    src_idx = source_img_inds.astype(jnp.int32)
    tgt_idx = target_img_inds.astype(jnp.int32)

    def const_spec(shape):
        return pl.BlockSpec(shape, lambda b, si, ti: (0,) * len(shape))

    grid_spec = pltpu.PrefetchScalarGridSpec(
        num_scalar_prefetch=2,                           # src/tgt indices -> SMEM
        grid=(B,),
        in_specs=[
            pl.BlockSpec((1, H, W * C), lambda b, si, ti: (si[b], 0, 0)),   # source frame
            pl.BlockSpec((1, H, W * C), lambda b, si, ti: (ti[b], 0, 0)),   # target frame
            const_spec((W * C, ncol)),                   # rs
            const_spec((W * C, ncol)),                   # rt
            const_spec((8, hp, H)),                      # lsel
            const_spec((1, 2 * wp)),                     # bias_row
            const_spec((2 * wp, 2 * out_hw)),            # wwb (block-diag resize columns)
            const_spec((out_hw, hp)),                    # wh_fused
        ],
        out_specs=pl.BlockSpec((1, 2, out_hw, out_hw), lambda b, si, ti: (b, 0, 0, 0)),
    )
    return pl.pallas_call(
        _flow_extract_kernel,
        out_shape=jax.ShapeDtypeStruct((B, 2, out_hw, out_hw), jnp.float32),
        grid_spec=grid_spec,
        compiler_params=pltpu.CompilerParams(dimension_semantics=("parallel",)),
    )(src_idx, tgt_idx, imgs_flat, imgs_flat,
      consts["rs"], consts["rt"], consts["lsel"], consts["bias_row"],
      consts["wwb"], consts["wh_fused"])


# ----------------------------------------------------------------------------
# Host-side constants: bilinear matrices (align_corners=True) + unfolded stub weights
# ----------------------------------------------------------------------------
def bilinear_weight_matrix(in_size, out_size, dtype=np.float32):
    """Row-stochastic (out_size, in_size) matrix: W @ x == 1-D bilinear resize with
    align_corners=True (matches torch.nn.functional.interpolate / RAFT upflow8)."""
    if out_size == 1:
        src = np.zeros((1,), dtype=np.float64)
    else:
        src = np.arange(out_size, dtype=np.float64) * (in_size - 1) / (out_size - 1)
    i0 = np.clip(np.floor(src).astype(np.int64), 0, in_size - 1)
    i1 = np.minimum(i0 + 1, in_size - 1)
    w1 = src - i0
    w0 = 1.0 - w1
    M = np.zeros((out_size, in_size), dtype=np.float64)
    M[np.arange(out_size), i0] += w0
    M[np.arange(out_size), i1] += w1
    return M.astype(dtype)


def build_flow_extract_constants(H, W, wfull, bias, out_size=128, dtype=jnp.float32):
    """Build all per-model constants once on host.

    wfull: (2, 2, 3, 8, 8) stub-conv weights [co, s(0=src,1=tgt), c, py, px]
    bias : (2,) stub-conv bias.
    `dtype` = compute dtype of the matmul constants (bf16 recommended on v6e/v7x)."""
    hp, wp = H // 8, W // 8
    WC = W * 3
    wf = np.asarray(wfull, np.float64)
    b = np.asarray(bias, np.float64)

    # Stage-1 right matrices: patch unfold along W + channels, conv weights folded in.
    #   Rs[(8j+px)*3 + c, py*2wp + co*wp + j] = wfull[co, s, c, py, px]
    R = np.zeros((2, WC, 8 * 2 * wp), np.float64)
    co_, s_, c_, py_, px_, j_ = np.meshgrid(
        np.arange(2), np.arange(2), np.arange(3), np.arange(8), np.arange(8),
        np.arange(wp), indexing="ij")
    rows = (8 * j_ + px_) * 3 + c_
    cols = py_ * (2 * wp) + co_ * wp + j_
    R[s_, rows, cols] = wf[co_, s_, c_, py_, px_]

    # Stage-2 row-selection matrices: L[py, i, h] = 1 iff h == 8*i + py.
    L = np.zeros((8, hp, H), np.float64)
    pyi, ii = np.meshgrid(np.arange(8), np.arange(hp), indexing="ij")
    L[pyi, ii, 8 * ii + pyi] = 1.0

    bias_row = np.concatenate([np.full((wp,), b[0]), np.full((wp,), b[1])])[None, :]

    # Fused, pre-composed bilinear resize: upflow8 (x8) then interp->128 (/8), scale folds to 1.
    wh_up = bilinear_weight_matrix(hp, H, np.float64)           # (H,   hp)
    ww_up = bilinear_weight_matrix(wp, W, np.float64)           # (W,   wp)
    wh_out = bilinear_weight_matrix(H, out_size, np.float64)    # (out, H)
    ww_out = bilinear_weight_matrix(W, out_size, np.float64)    # (out, W)
    scale = 8.0 * (1.0 / 8.0)
    wh_fused = scale * (wh_out @ wh_up)                         # (out, hp)
    ww_fused_t = ww_up.T @ ww_out.T                             # (wp,  out)
    wwb = np.zeros((2 * wp, 2 * out_size), np.float64)          # both flow planes in one matmul
    wwb[:wp, :out_size] = ww_fused_t
    wwb[wp:, out_size:] = ww_fused_t

    to = lambda a: jnp.asarray(a.astype(np.float32)).astype(dtype)
    return {
        "rs": to(R[0]), "rt": to(R[1]), "lsel": to(L),
        "bias_row": jnp.asarray(bias_row.astype(np.float32)),   # added to f32 accumulator
        "wwb": to(wwb), "wh_fused": to(wh_fused),
    }


# ----------------------------------------------------------------------------
# Plain-JAX, UNFUSED two-stage reference (f32)
# ----------------------------------------------------------------------------
def flow_extract_reference(images, src_inds, tgt_inds, wfull, bias, out_size=128):
    imgs = jnp.transpose(images, (0, 3, 1, 2))                  # (N, 3, H, W)
    src, tgt = imgs[src_inds], imgs[tgt_inds]
    B, C, H, W = src.shape
    hp, wp = H // 8, W // 8
    xs = src.reshape(B, C, hp, 8, wp, 8)
    xt = tgt.reshape(B, C, hp, 8, wp, 8)
    fl = (jnp.einsum("bcipjq,ocpq->boij", xs, wfull[:, 0]) +
          jnp.einsum("bcipjq,ocpq->boij", xt, wfull[:, 1]) +
          bias[None, :, None, None])                            # (B, 2, hp, wp)
    wh_up = jnp.asarray(bilinear_weight_matrix(hp, H))
    ww_up = jnp.asarray(bilinear_weight_matrix(wp, W))
    flows_high = 8.0 * jnp.einsum("oh,bchw,qw->bcoq", wh_up, fl, ww_up)
    wh_out = jnp.asarray(bilinear_weight_matrix(H, out_size))
    ww_out = jnp.asarray(bilinear_weight_matrix(W, out_size))
    return (1.0 / 8.0) * jnp.einsum("oh,bchw,qw->bcoq", wh_out, flows_high, ww_out)


# ----------------------------------------------------------------------------
if __name__ == "__main__":
    key = jax.random.PRNGKey(0)
    k_img, k_w, k_b = jax.random.split(key, 3)

    # 4 video frames, 32x32 RGB (divisible by 8); 2 (source, target) pairs.
    images = jax.random.uniform(k_img, (4, 32, 32, 3), dtype=jnp.float32)
    source_img_inds = jnp.array([0, 1], dtype=jnp.int32)
    target_img_inds = jnp.array([2, 3], dtype=jnp.int32)
    N, H, W, _ = images.shape

    # Deterministic stub-RAFT weights: 8x8-patch linear projection -> 2 flow channels.
    wfull = jax.random.normal(k_w, (2, 2, 3, 8, 8), dtype=jnp.float32) * 0.05
    bias = jax.random.normal(k_b, (2,), dtype=jnp.float32) * 0.1

    # Constants built ONCE on host and reused across forward calls.
    consts_f32 = build_flow_extract_constants(H, W, np.asarray(wfull), np.asarray(bias),
                                              out_size=128, dtype=jnp.float32)

    fwd = jax.jit(flow_extract_forward)
    flows = jax.block_until_ready(
        fwd(images, source_img_inds, target_img_inds, consts_f32))
    assert flows.shape == (2, 2, 128, 128) and flows.dtype == jnp.float32

    ref = jax.block_until_ready(
        flow_extract_reference(images, source_img_inds, target_img_inds, wfull, bias))
    np.testing.assert_allclose(np.asarray(flows), np.asarray(ref), rtol=1e-4, atol=1e-4)

    # bf16 MXU constants (recommended on v6e/v7x; keep f32 on v5e); f32 accumulation.
    consts_bf16 = build_flow_extract_constants(H, W, np.asarray(wfull), np.asarray(bias),
                                               out_size=128, dtype=jnp.bfloat16)
    flows_bf16 = jax.block_until_ready(
        fwd(images, source_img_inds, target_img_inds, consts_bf16))
    np.testing.assert_allclose(np.asarray(flows_bf16), np.asarray(ref),
                               rtol=5e-2, atol=5e-2)

    print("KERNEL_OK")
</pallas_src>

<mosaic_0001>
module attributes {stable_mosaic.version = 11 : i64} {
  func.func @_flow_extract_kernel(%arg0: i32, %arg1: memref<2xi32, #tpu.memory_space<smem>>, %arg2: memref<2xi32, #tpu.memory_space<smem>>, %arg3: memref<1x32x96xf32, #tpu.memory_space<vmem>>, %arg4: memref<1x32x96xf32, #tpu.memory_space<vmem>>, %arg5: memref<96x64xf32, #tpu.memory_space<vmem>>, %arg6: memref<96x64xf32, #tpu.memory_space<vmem>>, %arg7: memref<8x4x32xf32, #tpu.memory_space<vmem>>, %arg8: memref<1x8xf32, #tpu.memory_space<vmem>>, %arg9: memref<8x256xf32, #tpu.memory_space<vmem>>, %arg10: memref<128x4xf32, #tpu.memory_space<vmem>>, %arg11: memref<1x2x128x128xf32, #tpu.memory_space<vmem>>) attributes {dimension_semantics = [#tpu.dimension_semantics<parallel>], iteration_bounds = array<i64: 2>, scalar_prefetch = 2 : i64, scratch_operands = 0 : i64, tpu.core_type = #tpu.core_type<tc>, window_params = [{transform_indices = @transform_0, window_bounds = array<i64: 1, 32, 96>}, {transform_indices = @transform_1, window_bounds = array<i64: 1, 32, 96>}, {pipeline_mode = #tpu.pipeline_mode<synchronous>, transform_indices = @transform_2, window_bounds = array<i64: 96, 64>}, {pipeline_mode = #tpu.pipeline_mode<synchronous>, transform_indices = @transform_3, window_bounds = array<i64: 96, 64>}, {pipeline_mode = #tpu.pipeline_mode<synchronous>, transform_indices = @transform_4, window_bounds = array<i64: 8, 4, 32>}, {pipeline_mode = #tpu.pipeline_mode<synchronous>, transform_indices = @transform_5, window_bounds = array<i64: 1, 8>}, {pipeline_mode = #tpu.pipeline_mode<synchronous>, transform_indices = @transform_6, window_bounds = array<i64: 8, 256>}, {pipeline_mode = #tpu.pipeline_mode<synchronous>, transform_indices = @transform_7, window_bounds = array<i64: 128, 4>}, {transform_indices = @transform_8, window_bounds = array<i64: 1, 2, 128, 128>}]} {
    %c0 = arith.constant 0 : index
    %c0_0 = arith.constant 0 : index
    %c0_1 = arith.constant 0 : index
    %0 = vector.load %arg3[%c0, %c0_0, %c0_1] : memref<1x32x96xf32, #tpu.memory_space<vmem>>, vector<1x32x96xf32>
    %1 = vector.shape_cast %0 : vector<1x32x96xf32> to vector<32x96xf32>
    %c0_2 = arith.constant 0 : index
    %c0_3 = arith.constant 0 : index
    %c0_4 = arith.constant 0 : index
    %2 = vector.load %arg4[%c0_2, %c0_3, %c0_4] : memref<1x32x96xf32, #tpu.memory_space<vmem>>, vector<1x32x96xf32>
    %3 = vector.shape_cast %2 : vector<1x32x96xf32> to vector<32x96xf32>
    %c0_5 = arith.constant 0 : index
    %c0_6 = arith.constant 0 : index
    %4 = vector.load %arg5[%c0_5, %c0_6] : memref<96x64xf32, #tpu.memory_space<vmem>>, vector<96x64xf32>
    %cst = arith.constant dense<0.000000e+00> : vector<32x64xf32>
    %5 = tpu.matmul %1, %4, %cst {dimension_numbers = #tpu.dot_dimension_numbers<[1], [0], [0], [1], [0, 0, 1, 1], [], []>} : vector<32x96xf32>, vector<96x64xf32>, vector<32x64xf32> -> vector<32x64xf32>
    %c0_7 = arith.constant 0 : index
    %c0_8 = arith.constant 0 : index
    %6 = vector.load %arg6[%c0_7, %c0_8] : memref<96x64xf32, #tpu.memory_space<vmem>>, vector<96x64xf32>
    %cst_9 = arith.constant dense<0.000000e+00> : vector<32x64xf32>
    %7 = tpu.matmul %3, %6, %cst_9 {dimension_numbers = #tpu.dot_dimension_numbers<[1], [0], [0], [1], [0, 0, 1, 1], [], []>} : vector<32x96xf32>, vector<96x64xf32>, vector<32x64xf32> -> vector<32x64xf32>
    %8 = arith.addf %5, %7 : vector<32x64xf32>
    %cst_10 = arith.constant 0.000000e+00 : f32
    %9 = vector.broadcast %cst_10 : f32 to vector<4x8xf32>
    %10 = vector.extract_strided_slice %8 {offsets = [0, 0], sizes = [32, 8], strides = [1, 1]} : vector<32x64xf32> to vector<32x8xf32>
    %c0_11 = arith.constant 0 : index
    %c0_12 = arith.constant 0 : index
    %c0_13 = arith.constant 0 : index
    %11 = vector.load %arg7[%c0_11, %c0_12, %c0_13] : memref<8x4x32xf32, #tpu.memory_space<vmem>>, vector<1x4x32xf32>
    %12 = vector.shape_cast %11 : vector<1x4x32xf32> to vector<4x32xf32>
    %cst_14 = arith.constant dense<0.000000e+00> : vector<4x8xf32>
    %13 = tpu.matmul %12, %10, %cst_14 {dimension_numbers = #tpu.dot_dimension_numbers<[1], [0], [0], [1], [0, 0, 1, 1], [], []>} : vector<4x32xf32>, vector<32x8xf32>, vector<4x8xf32> -> vector<4x8xf32>
    %14 = arith.addf %9, %13 : vector<4x8xf32>
    %15 = vector.extract_strided_slice %8 {offsets = [0, 8], sizes = [32, 8], strides = [1, 1]} : vector<32x64xf32> to vector<32x8xf32>
    %c1 = arith.constant 1 : index
    %c0_15 = arith.constant 0 : index
    %c0_16 = arith.constant 0 : index
    %16 = vector.load %arg7[%c1, %c0_15, %c0_16] : memref<8x4x32xf32, #tpu.memory_space<vmem>>, vector<1x4x32xf32>
    %17 = vector.shape_cast %16 : vector<1x4x32xf32> to vector<4x32xf32>
    %cst_17 = arith.constant dense<0.000000e+00> : vector<4x8xf32>
    %18 = tpu.matmul %17, %15, %cst_17 {dimension_numbers = #tpu.dot_dimension_numbers<[1], [0], [0], [1], [0, 0, 1, 1], [], []>} : vector<4x32xf32>, vector<32x8xf32>, vector<4x8xf32> -> vector<4x8xf32>
    %19 = arith.addf %14, %18 : vector<4x8xf32>
    %20 = vector.extract_strided_slice %8 {offsets = [0, 16], sizes = [32, 8], strides = [1, 1]} : vector<32x64xf32> to vector<32x8xf32>
    %c2 = arith.constant 2 : index
    %c0_18 = arith.constant 0 : index
    %c0_19 = arith.constant 0 : index
    %21 = vector.load %arg7[%c2, %c0_18, %c0_19] : memref<8x4x32xf32, #tpu.memory_space<vmem>>, vector<1x4x32xf32>
    %22 = vector.shape_cast %21 : vector<1x4x32xf32> to vector<4x32xf32>
    %cst_20 = arith.constant dense<0.000000e+00> : vector<4x8xf32>
    %23 = tpu.matmul %22, %20, %cst_20 {dimension_numbers = #tpu.dot_dimension_numbers<[1], [0], [0], [1], [0, 0, 1, 1], [], []>} : vector<4x32xf32>, vector<32x8xf32>, vector<4x8xf32> -> vector<4x8xf32>
    %24 = arith.addf %19, %23 : vector<4x8xf32>
    %25 = vector.extract_strided_slice %8 {offsets = [0, 24], sizes = [32, 8], strides = [1, 1]} : vector<32x64xf32> to vector<32x8xf32>
    %c3 = arith.constant 3 : index
    %c0_21 = arith.constant 0 : index
    %c0_22 = arith.constant 0 : index
    %26 = vector.load %arg7[%c3, %c0_21, %c0_22] : memref<8x4x32xf32, #tpu.memory_space<vmem>>, vector<1x4x32xf32>
    %27 = vector.shape_cast %26 : vector<1x4x32xf32> to vector<4x32xf32>
    %cst_23 = arith.constant dense<0.000000e+00> : vector<4x8xf32>
    %28 = tpu.matmul %27, %25, %cst_23 {dimension_numbers = #tpu.dot_dimension_numbers<[1], [0], [0], [1], [0, 0, 1, 1], [], []>} : vector<4x32xf32>, vector<32x8xf32>, vector<4x8xf32> -> vector<4x8xf32>
    %29 = arith.addf %24, %28 : vector<4x8xf32>
    %30 = vector.extract_strided_slice %8 {offsets = [0, 32], sizes = [32, 8], strides = [1, 1]} : vector<32x64xf32> to vector<32x8xf32>
    %c4 = arith.constant 4 : index
    %c0_24 = arith.constant 0 : index
    %c0_25 = arith.constant 0 : index
    %31 = vector.load %arg7[%c4, %c0_24, %c0_25] : memref<8x4x32xf32, #tpu.memory_space<vmem>>, vector<1x4x32xf32>
    %32 = vector.shape_cast %31 : vector<1x4x32xf32> to vector<4x32xf32>
    %cst_26 = arith.constant dense<0.000000e+00> : vector<4x8xf32>
    %33 = tpu.matmul %32, %30, %cst_26 {dimension_numbers = #tpu.dot_dimension_numbers<[1], [0], [0], [1], [0, 0, 1, 1], [], []>} : vector<4x32xf32>, vector<32x8xf32>, vector<4x8xf32> -> vector<4x8xf32>
    %34 = arith.addf %29, %33 : vector<4x8xf32>
    %35 = vector.extract_strided_slice %8 {offsets = [0, 40], sizes = [32, 8], strides = [1, 1]} : vector<32x64xf32> to vector<32x8xf32>
    %c5 = arith.constant 5 : index
    %c0_27 = arith.constant 0 : index
    %c0_28 = arith.constant 0 : index
    %36 = vector.load %arg7[%c5, %c0_27, %c0_28] : memref<8x4x32xf32, #tpu.memory_space<vmem>>, vector<1x4x32xf32>
    %37 = vector.shape_cast %36 : vector<1x4x32xf32> to vector<4x32xf32>
    %cst_29 = arith.constant dense<0.000000e+00> : vector<4x8xf32>
    %38 = tpu.matmul %37, %35, %cst_29 {dimension_numbers = #tpu.dot_dimension_numbers<[1], [0], [0], [1], [0, 0, 1, 1], [], []>} : vector<4x32xf32>, vector<32x8xf32>, vector<4x8xf32> -> vector<4x8xf32>
    %39 = arith.addf %34, %38 : vector<4x8xf32>
    %40 = vector.extract_strided_slice %8 {offsets = [0, 48], sizes = [32, 8], strides = [1, 1]} : vector<32x64xf32> to vector<32x8xf32>
    %c6 = arith.constant 6 : index
    %c0_30 = arith.constant 0 : index
    %c0_31 = arith.constant 0 : index
    %41 = vector.load %arg7[%c6, %c0_30, %c0_31] : memref<8x4x32xf32, #tpu.memory_space<vmem>>, vector<1x4x32xf32>
    %42 = vector.shape_cast %41 : vector<1x4x32xf32> to vector<4x32xf32>
    %cst_32 = arith.constant dense<0.000000e+00> : vector<4x8xf32>
    %43 = tpu.matmul %42, %40, %cst_32 {dimension_numbers = #tpu.dot_dimension_numbers<[1], [0], [0], [1], [0, 0, 1, 1], [], []>} : vector<4x32xf32>, vector<32x8xf32>, vector<4x8xf32> -> vector<4x8xf32>
    %44 = arith.addf %39, %43 : vector<4x8xf32>
    %45 = vector.extract_strided_slice %8 {offsets = [0, 56], sizes = [32, 8], strides = [1, 1]} : vector<32x64xf32> to vector<32x8xf32>
    %c7 = arith.constant 7 : index
    %c0_33 = arith.constant 0 : index
    %c0_34 = arith.constant 0 : index
    %46 = vector.load %arg7[%c7, %c0_33, %c0_34] : memref<8x4x32xf32, #tpu.memory_space<vmem>>, vector<1x4x32xf32>
    %47 = vector.shape_cast %46 : vector<1x4x32xf32> to vector<4x32xf32>
    %cst_35 = arith.constant dense<0.000000e+00> : vector<4x8xf32>
    %48 = tpu.matmul %47, %45, %cst_35 {dimension_numbers = #tpu.dot_dimension_numbers<[1], [0], [0], [1], [0, 0, 1, 1], [], []>} : vector<4x32xf32>, vector<32x8xf32>, vector<4x8xf32> -> vector<4x8xf32>
    %49 = arith.addf %44, %48 : vector<4x8xf32>
    %c0_36 = arith.constant 0 : index
    %c0_37 = arith.constant 0 : index
    %50 = vector.load %arg8[%c0_36, %c0_37] : memref<1x8xf32, #tpu.memory_space<vmem>>, vector<1x8xf32>
    %51 = vector.broadcast %50 : vector<1x8xf32> to vector<4x8xf32>
    %52 = arith.addf %49, %51 : vector<4x8xf32>
    %c0_38 = arith.constant 0 : index
    %c0_39 = arith.constant 0 : index
    %53 = vector.load %arg9[%c0_38, %c0_39] : memref<8x256xf32, #tpu.memory_space<vmem>>, vector<8x256xf32>
    %cst_40 = arith.constant dense<0.000000e+00> : vector<4x256xf32>
    %54 = tpu.matmul %52, %53, %cst_40 {dimension_numbers = #tpu.dot_dimension_numbers<[1], [0], [0], [1], [0, 0, 1, 1], [], []>} : vector<4x8xf32>, vector<8x256xf32>, vector<4x256xf32> -> vector<4x256xf32>
    %c0_41 = arith.constant 0 : index
    %c0_42 = arith.constant 0 : index
    %55 = vector.load %arg10[%c0_41, %c0_42] : memref<128x4xf32, #tpu.memory_space<vmem>>, vector<128x4xf32>
    %cst_43 = arith.constant dense<0.000000e+00> : vector<128x256xf32>
    %56 = tpu.matmul %55, %54, %cst_43 {dimension_numbers = #tpu.dot_dimension_numbers<[1], [0], [0], [1], [0, 0, 1, 1], [], []>} : vector<128x4xf32>, vector<4x256xf32>, vector<128x256xf32> -> vector<128x256xf32>
    %57 = vector.extract_strided_slice %56 {offsets = [0, 0], sizes = [128, 128], strides = [1, 1]} : vector<128x256xf32> to vector<128x128xf32>
    %c0_44 = arith.constant 0 : index
    %c0_45 = arith.constant 0 : index
    %c0_46 = arith.constant 0 : index
    %c0_47 = arith.constant 0 : index
    %58 = vector.load %arg11[%c0_44, %c0_45, %c0_46, %c0_47] : memref<1x2x128x128xf32, #tpu.memory_space<vmem>>, vector<1x1x128x128xf32>
    %59 = vector.shape_cast %58 : vector<1x1x128x128xf32> to vector<128x128xf32>
    %60 = vector.shape_cast %57 : vector<128x128xf32> to vector<1x1x128x128xf32>
    tpu.vector_store %arg11[%c0_44, %c0_45, %c0_46, %c0_47], %60 {strides = array<i32>} : memref<1x2x128x128xf32, #tpu.memory_space<vmem>>, vector<1x1x128x128xf32>,
    %61 = vector.extract_strided_slice %56 {offsets = [0, 128], sizes = [128, 128], strides = [1, 1]} : vector<128x256xf32> to vector<128x128xf32>
    %c0_48 = arith.constant 0 : index
    %c1_49 = arith.constant 1 : index
    %c0_50 = arith.constant 0 : index
    %c0_51 = arith.constant 0 : index
    %62 = vector.load %arg11[%c0_48, %c1_49, %c0_50, %c0_51] : memref<1x2x128x128xf32, #tpu.memory_space<vmem>>, vector<1x1x128x128xf32>
    %63 = vector.shape_cast %62 : vector<1x1x128x128xf32> to vector<128x128xf32>
    %64 = vector.shape_cast %61 : vector<128x128xf32> to vector<1x1x128x128xf32>
    tpu.vector_store %arg11[%c0_48, %c1_49, %c0_50, %c0_51], %64 {strides = array<i32>} : memref<1x2x128x128xf32, #tpu.memory_space<vmem>>, vector<1x1x128x128xf32>,
    return
  }
  func.func @transform_0(%arg0: i32, %arg1: memref<2xi32, #tpu.memory_space<smem>>, %arg2: memref<2xi32, #tpu.memory_space<smem>>) -> (i32, i32, i32) {
    %0 = arith.index_cast %arg0 : i32 to index
    %1 = memref.load %arg1[%0] : memref<2xi32, #tpu.memory_space<smem>>
    %c0_i32 = arith.constant 0 : i32
    %c0_i32_0 = arith.constant 0 : i32
    %c0_i32_1 = arith.constant 0 : i32
    return %1, %c0_i32, %c0_i32_0 : i32, i32, i32
  }
  func.func @transform_1(%arg0: i32, %arg1: memref<2xi32, #tpu.memory_space<smem>>, %arg2: memref<2xi32, #tpu.memory_space<smem>>) -> (i32, i32, i32) {
    %0 = arith.index_cast %arg0 : i32 to index
    %1 = memref.load %arg2[%0] : memref<2xi32, #tpu.memory_space<smem>>
    %c0_i32 = arith.constant 0 : i32
    %c0_i32_0 = arith.constant 0 : i32
    %c0_i32_1 = arith.constant 0 : i32
    return %1, %c0_i32, %c0_i32_0 : i32, i32, i32
  }
  func.func @transform_2(%arg0: i32, %arg1: memref<2xi32, #tpu.memory_space<smem>>, %arg2: memref<2xi32, #tpu.memory_space<smem>>) -> (i32, i32) {
    %c0_i32 = arith.constant 0 : i32
    %c0_i32_0 = arith.constant 0 : i32
    %c0_i32_1 = arith.constant 0 : i32
    return %c0_i32, %c0_i32_0 : i32, i32
  }
  func.func @transform_3(%arg0: i32, %arg1: memref<2xi32, #tpu.memory_space<smem>>, %arg2: memref<2xi32, #tpu.memory_space<smem>>) -> (i32, i32) {
    %c0_i32 = arith.constant 0 : i32
    %c0_i32_0 = arith.constant 0 : i32
    %c0_i32_1 = arith.constant 0 : i32
    return %c0_i32, %c0_i32_0 : i32, i32
  }
  func.func @transform_4(%arg0: i32, %arg1: memref<2xi32, #tpu.memory_space<smem>>, %arg2: memref<2xi32, #tpu.memory_space<smem>>) -> (i32, i32, i32) {
    %c0_i32 = arith.constant 0 : i32
    %c0_i32_0 = arith.constant 0 : i32
    %c0_i32_1 = arith.constant 0 : i32
    %c0_i32_2 = arith.constant 0 : i32
    return %c0_i32, %c0_i32_0, %c0_i32_1 : i32, i32, i32
  }
  func.func @transform_5(%arg0: i32, %arg1: memref<2xi32, #tpu.memory_space<smem>>, %arg2: memref<2xi32, #tpu.memory_space<smem>>) -> (i32, i32) {
    %c0_i32 = arith.constant 0 : i32
    %c0_i32_0 = arith.constant 0 : i32
    %c0_i32_1 = arith.constant 0 : i32
    return %c0_i32, %c0_i32_0 : i32, i32
  }
  func.func @transform_6(%arg0: i32, %arg1: memref<2xi32, #tpu.memory_space<smem>>, %arg2: memref<2xi32, #tpu.memory_space<smem>>) -> (i32, i32) {
    %c0_i32 = arith.constant 0 : i32
    %c0_i32_0 = arith.constant 0 : i32
    %c0_i32_1 = arith.constant 0 : i32
    return %c0_i32, %c0_i32_0 : i32, i32
  }
  func.func @transform_7(%arg0: i32, %arg1: memref<2xi32, #tpu.memory_space<smem>>, %arg2: memref<2xi32, #tpu.memory_space<smem>>) -> (i32, i32) {
    %c0_i32 = arith.constant 0 : i32
    %c0_i32_0 = arith.constant 0 : i32
    %c0_i32_1 = arith.constant 0 : i32
    return %c0_i32, %c0_i32_0 : i32, i32
  }
  func.func @transform_8(%arg0: i32, %arg1: memref<2xi32, #tpu.memory_space<smem>>, %arg2: memref<2xi32, #tpu.memory_space<smem>>) -> (i32, i32, i32, i32) {
    %c0_i32 = arith.constant 0 : i32
    %c0_i32_0 = arith.constant 0 : i32
    %c0_i32_1 = arith.constant 0 : i32
    %c0_i32_2 = arith.constant 0 : i32
    return %arg0, %c0_i32, %c0_i32_0, %c0_i32_1 : i32, i32, i32, i32
  }
}

</mosaic_0001>

<llo_original>
// kernel: flow_extract_forward.1
$region0: #{flow_extract_forward.1}
  #allocation0 [shape = 'u32[]', space=smem, size = 0x4, offset = 0x4, fixed_abs, tag = 'smem constant byte address 0x4 - core index']
  #allocation1 [shape = 'u32[144,128]{1,0:T(1,128)}', space=vmem, size = 0x12000, scoped, tag = 'internal scratch']
  #allocation2 [shape = 's32[1]{0}', space=sflag, size = 0x4, scoped, tag = 'scoped memory for flow_extract_forward.1']
  #allocation3 [shape = 'u8[512]{0}', space=smem, size = 0x200, scoped, tag = 'prefetched SMEM operand 0']
  #allocation4 [shape = 'u8[512]{0}', space=smem, size = 0x200, scoped, tag = 'prefetched SMEM operand 1']
  %s0 = inlined_call_operand.vmem [shape: s32[2], index: 0, kind: input, shape index: {}]
  %s1 = inlined_call_operand.vmem [shape: s32[2], index: 1, kind: input, shape index: {}]
  %s2 = inlined_call_operand.vmem [shape: f32[4,32,96], index: 2, kind: input, shape index: {}, may-alias: {2,3}]
  %s3 = inlined_call_operand.vmem [shape: f32[4,32,96], index: 3, kind: input, shape index: {}, may-alias: {2,3}]
  %s4 = inlined_call_operand.vmem [shape: f32[96,64], index: 4, kind: input, shape index: {}]
  %s5 = inlined_call_operand.vmem [shape: f32[96,64], index: 5, kind: input, shape index: {}]
  %s6 = inlined_call_operand.vmem [shape: f32[8,4,32], index: 6, kind: input, shape index: {}]
  %s7 = inlined_call_operand.vmem [shape: f32[1,8], index: 7, kind: input, shape index: {}]
  %s8 = inlined_call_operand.vmem [shape: f32[8,256], index: 8, kind: input, shape index: {}]
  %s9 = inlined_call_operand.vmem [shape: f32[128,4], index: 9, kind: input, shape index: {}]
  %s10 = inlined_call_operand.hbm [shape: f32[2,2,128,128], index: 10, kind: output, shape index: {}]
  %s11 = sld [smem:[#allocation0]]
  $region65: #{flow_extract_forward.1} parent=0
    _
  %s13 = ssub.s32 1, %s11
  %s14 = scalar_select 0, %s13, %s11
  %s15 = sshll.u32 %s0, 4
  %s16 = int_to_ptr.vmem [resolvable:$true] %s15
  %18 = dma.vmem_to_smem %s16, 16, [#allocation3], [#allocation2]
  %s19 = sshll.u32 %s1, 4
  %s20 = int_to_ptr.vmem [resolvable:$true] %s19
  %22 = dma.vmem_to_smem %s20, 16, [#allocation4], [#allocation2]
  %23 = dma.done [#allocation2], 32
  %24 = sfence
  $region1: #{flow_extract_forward.1} parent=0
    #allocation5 [shape = 'u8[262144]{0}', space=vmem, size = 0x40000, scoped, tag = 'output window, operand 0']
    #allocation6 [shape = 's32[2]{0}', space=sflag, size = 0x8, scoped, tag = 'scoped memory for flow_extract_forward.1']
    %25 = vsyncpa [#allocation6], 0
    %s26 = scalar_lea.sflag [#allocation6], 1
    %27 = vsyncpa %s26, 0
    loop: start=0, step=1, limit=4
    $region2: #{flow_extract_forward.1} parent=1 // loop_pre_header
      _
    $region3: #{flow_extract_forward.1} parent=1 // loop_header
      %s29 = sphi 0, %s33
      %p30 = scmp.ge.s32.totalorder %s29, 4
      %s41 = sphi 0, %s43
      %s44 = sphi 0, %s41
      %s45 = sphi 0, %s44
      %s61 = sphi 0, %s45
      %s69 = sphi 0, %s71
      %s72 = sphi 0, %s69
      %s73 = sphi 0, %s72
      %s89 = sphi 0, %s73
      %s93 = sphi 0, %s93
      %s95 = sphi 0, %s93
      %s96 = sphi 0, %s95
      %s110 = sphi 0, %s96
      %s114 = sphi 0, %s114
      %s116 = sphi 0, %s114
      %s117 = sphi 0, %s116
      %s131 = sphi 0, %s117
      %s135 = sphi 0, %s135
      %s137 = sphi 0, %s135
      %s138 = sphi 0, %s137
      %s152 = sphi 0, %s138
      %s156 = sphi 0, %s156
      %s158 = sphi 0, %s156
      %s159 = sphi 0, %s158
      %s173 = sphi 0, %s159
      %s177 = sphi 0, %s177
      %s179 = sphi 0, %s177
      %s180 = sphi 0, %s179
      %s194 = sphi 0, %s180
      %s198 = sphi 0, %s198
      %s200 = sphi 0, %s198
      %s201 = sphi 0, %s200
      %s215 = sphi 0, %s201
      %s221 = sphi 0, %s223
      %s224 = sphi 0, %s221
      %s225 = sphi 0, %s224
      %s241 = sphi 0, %s225
    $region4: #{flow_extract_forward.1} parent=1 // loop_header_branch
      %32 = sbr.rel (%p30) target = $region8
    $region5: #{flow_extract_forward.1} parent=1 // loop_body
      %s34 = ssub.s32 %s29, 1
      %s35 = ssub.s32 %s29, 2
      %s36 = sadd.s32 %s29, 1
      %s37 = sld [smem:[#allocation3 + %s29]]
      %s38 = sld [smem:[#allocation3 + %s36]]
      %s39 = ssub.s32 %s37, %s38
      %p40 = scmp.eq.s32.totalorder %s39, 0
      %s42 = sadd.s32 %s41, 1
      %s43 = scalar_select %p40, %s41, %s42
      %p46 = pneg %p40
      %p47 = scmp.eq.s32.totalorder %s29, 1
      %p48 = por %p46, %p47
      %p49 = scmp.ne.s32.totalorder %s41, %s44
      %p50 = scmp.eq.s32.totalorder %s29, 0
      %p51 = por %p49, %p50
      %p52 = scmp.ne.s32.totalorder %s41, %s44
      %p53 = scmp.eq.s32.totalorder %s34, 1
      %p54 = por %p52, %p53
      %p55 = scmp.ne.s32.totalorder %s44, %s45
      %p56 = scmp.eq.s32.totalorder %s34, 0
      %p57 = por %p55, %p56
      %p58 = scmp.ne.s32.totalorder %s44, %s45
      %p59 = scmp.eq.s32.totalorder %s35, 1
      %p60 = por %p58, %p59
      %p62 = scmp.ne.s32.totalorder %s45, %s61
      %p63 = scmp.eq.s32.totalorder %s35, 0
      %p64 = por %p62, %p63
      %s65 = sld [smem:[#allocation4 + %s29]]
      %s66 = sld [smem:[#allocation4 + %s36]]
      %s67 = ssub.s32 %s65, %s66
      %p68 = scmp.eq.s32.totalorder %s67, 0
      %s70 = sadd.s32 %s69, 1
      %s71 = scalar_select %p68, %s69, %s70
      %p74 = pneg %p68
      %p75 = scmp.eq.s32.totalorder %s29, 1
      %p76 = por %p74, %p75
      %p77 = scmp.ne.s32.totalorder %s69, %s72
      %p78 = scmp.eq.s32.totalorder %s29, 0
      %p79 = por %p77, %p78
      %p80 = scmp.ne.s32.totalorder %s69, %s72
      %p81 = scmp.eq.s32.totalorder %s34, 1
      %p82 = por %p80, %p81
      %p83 = scmp.ne.s32.totalorder %s72, %s73
      %p84 = scmp.eq.s32.totalorder %s34, 0
      %p85 = por %p83, %p84
      %p86 = scmp.ne.s32.totalorder %s72, %s73
      %p87 = scmp.eq.s32.totalorder %s35, 1
      %p88 = por %p86, %p87
      %p90 = scmp.ne.s32.totalorder %s73, %s89
      %p91 = scmp.eq.s32.totalorder %s35, 0
      %p92 = por %p90, %p91
      %s94 = sadd.s32 %s93, 1
      %p97 = scmp.eq.s32.totalorder %s29, 1
      %p98 = scmp.ne.s32.totalorder %s93, %s95
      %p99 = scmp.eq.s32.totalorder %s29, 0
      %p100 = por %p98, %p99
      %p101 = scmp.ne.s32.totalorder %s93, %s95
      %p102 = scmp.eq.s32.totalorder %s34, 1
      %p103 = por %p101, %p102
      %p104 = scmp.ne.s32.totalorder %s95, %s96
      %p105 = scmp.eq.s32.totalorder %s34, 0
      %p106 = por %p104, %p105
      %p107 = scmp.ne.s32.totalorder %s95, %s96
      %p108 = scmp.eq.s32.totalorder %s35, 1
      %p109 = por %p107, %p108
      %p111 = scmp.ne.s32.totalorder %s96, %s110
      %p112 = scmp.eq.s32.totalorder %s35, 0
      %p113 = por %p111, %p112
      %s115 = sadd.s32 %s114, 1
      %p118 = scmp.eq.s32.totalorder %s29, 1
      %p119 = scmp.ne.s32.totalorder %s114, %s116
      %p120 = scmp.eq.s32.totalorder %s29, 0
      %p121 = por %p119, %p120
      %p122 = scmp.ne.s32.totalorder %s114, %s116
      %p123 = scmp.eq.s32.totalorder %s34, 1
      %p124 = por %p122, %p123
      %p125 = scmp.ne.s32.totalorder %s116, %s117
      %p126 = scmp.eq.s32.totalorder %s34, 0
      %p127 = por %p125, %p126
      %p128 = scmp.ne.s32.totalorder %s116, %s117
      %p129 = scmp.eq.s32.totalorder %s35, 1
      %p130 = por %p128, %p129
      %p132 = scmp.ne.s32.totalorder %s117, %s131
      %p133 = scmp.eq.s32.totalorder %s35, 0
      %p134 = por %p132, %p133
      %s136 = sadd.s32 %s135, 1
      %p139 = scmp.eq.s32.totalorder %s29, 1
      %p140 = scmp.ne.s32.totalorder %s135, %s137
      %p141 = scmp.eq.s32.totalorder %s29, 0
      %p142 = por %p140, %p141
      %p143 = scmp.ne.s32.totalorder %s135, %s137
      %p144 = scmp.eq.s32.totalorder %s34, 1
      %p145 = por %p143, %p144
      %p146 = scmp.ne.s32.totalorder %s137, %s138
      %p147 = scmp.eq.s32.totalorder %s34, 0
      %p148 = por %p146, %p147
      %p149 = scmp.ne.s32.totalorder %s137, %s138
      %p150 = scmp.eq.s32.totalorder %s35, 1
      %p151 = por %p149, %p150
      %p153 = scmp.ne.s32.totalorder %s138, %s152
      %p154 = scmp.eq.s32.totalorder %s35, 0
      %p155 = por %p153, %p154
      %s157 = sadd.s32 %s156, 1
      %p160 = scmp.eq.s32.totalorder %s29, 1
      %p161 = scmp.ne.s32.totalorder %s156, %s158
      %p162 = scmp.eq.s32.totalorder %s29, 0
      %p163 = por %p161, %p162
      %p164 = scmp.ne.s32.totalorder %s156, %s158
      %p165 = scmp.eq.s32.totalorder %s34, 1
      %p166 = por %p164, %p165
      %p167 = scmp.ne.s32.totalorder %s158, %s159
      %p168 = scmp.eq.s32.totalorder %s34, 0
      %p169 = por %p167, %p168
      %p170 = scmp.ne.s32.totalorder %s158, %s159
      %p171 = scmp.eq.s32.totalorder %s35, 1
      %p172 = por %p170, %p171
      %p174 = scmp.ne.s32.totalorder %s159, %s173
      %p175 = scmp.eq.s32.totalorder %s35, 0
      %p176 = por %p174, %p175
      %s178 = sadd.s32 %s177, 1
      %p181 = scmp.eq.s32.totalorder %s29, 1
      %p182 = scmp.ne.s32.totalorder %s177, %s179
      %p183 = scmp.eq.s32.totalorder %s29, 0
      %p184 = por %p182, %p183
      %p185 = scmp.ne.s32.totalorder %s177, %s179
      %p186 = scmp.eq.s32.totalorder %s34, 1
      %p187 = por %p185, %p186
      %p188 = scmp.ne.s32.totalorder %s179, %s180
      %p189 = scmp.eq.s32.totalorder %s34, 0
      %p190 = por %p188, %p189
      %p191 = scmp.ne.s32.totalorder %s179, %s180
      %p192 = scmp.eq.s32.totalorder %s35, 1
      %p193 = por %p191, %p192
      %p195 = scmp.ne.s32.totalorder %s180, %s194
      %p196 = scmp.eq.s32.totalorder %s35, 0
      %p197 = por %p195, %p196
      %s199 = sadd.s32 %s198, 1
      %p202 = scmp.eq.s32.totalorder %s29, 1
      %p203 = scmp.ne.s32.totalorder %s198, %s200
      %p204 = scmp.eq.s32.totalorder %s29, 0
      %p205 = por %p203, %p204
      %p206 = scmp.ne.s32.totalorder %s198, %s200
      %p207 = scmp.eq.s32.totalorder %s34, 1
      %p208 = por %p206, %p207
      %p209 = scmp.ne.s32.totalorder %s200, %s201
      %p210 = scmp.eq.s32.totalorder %s34, 0
      %p211 = por %p209, %p210
      %p212 = scmp.ne.s32.totalorder %s200, %s201
      %p213 = scmp.eq.s32.totalorder %s35, 1
      %p214 = por %p212, %p213
      %p216 = scmp.ne.s32.totalorder %s201, %s215
      %p217 = scmp.eq.s32.totalorder %s35, 0
      %p218 = por %p216, %p217
      %s219 = ssub.s32 %s29, %s36
      %p220 = scmp.eq.s32.totalorder %s219, 0
      %s222 = sadd.s32 %s221, 1
      %s223 = scalar_select %p220, %s221, %s222
      %p226 = pneg %p220
      %p227 = scmp.eq.s32.totalorder %s29, 1
      %p228 = por %p226, %p227
      %p229 = scmp.ne.s32.totalorder %s221, %s224
      %p230 = scmp.eq.s32.totalorder %s29, 0
      %p231 = por %p229, %p230
      %p232 = scmp.ne.s32.totalorder %s221, %s224
      %p233 = scmp.eq.s32.totalorder %s34, 1
      %p234 = por %p232, %p233
      %p235 = scmp.ne.s32.totalorder %s224, %s225
      %p236 = scmp.eq.s32.totalorder %s34, 0
      %p237 = por %p235, %p236
      %p238 = scmp.ne.s32.totalorder %s224, %s225
      %p239 = scmp.eq.s32.totalorder %s35, 1
      %p240 = por %p238, %p239
      %p242 = scmp.ne.s32.totalorder %s225, %s241
      %p243 = scmp.eq.s32.totalorder %s35, 0
      %p244 = por %p242, %p243
      %p245 = scmp.le.s32.totalorder 1, %s29
      %p246 = scmp.lt.s32.totalorder %s29, 3
      %p247 = pnand %p245, %p246
      %p248 = pneg %p247
      // Predicated region
      $region9: #{flow_extract_forward.1} parent=5 // pred_check
        _
      $region10: #{flow_extract_forward.1} parent=5 // pred_check_branch
        %250 = sbr.rel (%p247) target = $region12
      $region11: #{flow_extract_forward.1} parent=5 // pred_region
        %s251 = ssub.s32 %s29, 1
        // Predicated region
        $region13: #{flow_extract_forward.1} parent=11 // pred_check
          %p252 = pneg %p106
        $region14: #{flow_extract_forward.1} parent=11 // pred_check_branch
          %254 = sbr.rel (%p252) target = $region16
        $region15: #{flow_extract_forward.1} parent=11 // pred_region
          _
        $region16: #{flow_extract_forward.1} parent=11 // pred_fallthru
          _
        // Predicated region
        $region17: #{flow_extract_forward.1} parent=11 // pred_check
          %p255 = pneg %p127
        $region18: #{flow_extract_forward.1} parent=11 // pred_check_branch
          %257 = sbr.rel (%p255) target = $region20
        $region19: #{flow_extract_forward.1} parent=11 // pred_region
          _
        $region20: #{flow_extract_forward.1} parent=11 // pred_fallthru
          _
        // Predicated region
        $region21: #{flow_extract_forward.1} parent=11 // pred_check
          %p258 = pneg %p148
        $region22: #{flow_extract_forward.1} parent=11 // pred_check_branch
          %260 = sbr.rel (%p258) target = $region24
        $region23: #{flow_extract_forward.1} parent=11 // pred_region
          _
        $region24: #{flow_extract_forward.1} parent=11 // pred_fallthru
          _
        // Predicated region
        $region25: #{flow_extract_forward.1} parent=11 // pred_check
          %p261 = pneg %p169
        $region26: #{flow_extract_forward.1} parent=11 // pred_check_branch
          %263 = sbr.rel (%p261) target = $region28
        $region27: #{flow_extract_forward.1} parent=11 // pred_region
          _
        $region28: #{flow_extract_forward.1} parent=11 // pred_fallthru
          _
        // Predicated region
        $region29: #{flow_extract_forward.1} parent=11 // pred_check
          %p264 = pneg %p190
        $region30: #{flow_extract_forward.1} parent=11 // pred_check_branch
          %266 = sbr.rel (%p264) target = $region32
        $region31: #{flow_extract_forward.1} parent=11 // pred_region
          _
        $region32: #{flow_extract_forward.1} parent=11 // pred_fallthru
          _
        // Predicated region
        $region33: #{flow_extract_forward.1} parent=11 // pred_check
          %p267 = pneg %p211
        $region34: #{flow_extract_forward.1} parent=11 // pred_check_branch
          %269 = sbr.rel (%p267) target = $region36
        $region35: #{flow_extract_forward.1} parent=11 // pred_region
          _
        $region36: #{flow_extract_forward.1} parent=11 // pred_fallthru
          _
      $region12: #{flow_extract_forward.1} parent=5 // pred_fallthru
        _
      %p270 = scmp.lt.s32.totalorder %s29, 2
      // Predicated region
      $region37: #{flow_extract_forward.1} parent=5 // pred_check
        %p271 = pneg %p270
      $region38: #{flow_extract_forward.1} parent=5 // pred_check_branch
        %273 = sbr.rel (%p271) target = $region40
      $region39: #{flow_extract_forward.1} parent=5 // pred_region
        // Predicated region
        $region41: #{flow_extract_forward.1} parent=39 // pred_check
          %p274 = pneg %p51
        $region42: #{flow_extract_forward.1} parent=39 // pred_check_branch
          %276 = sbr.rel (%p274) target = $region44
        $region43: #{flow_extract_forward.1} parent=39 // pred_region
          %s277 = sld [smem:[#allocation3 + %s29]]
          %p278 = scmp.lt.s32.totalorder %s277, 3
          %s279 = scalar_select %p278, %s277, 3
          %s280 = smul.addr %s279, 4
          %s281 = smul.addr %s280, 8
          %s282 = scalar_lea.vmem %s2, %s281
          %s283 = sld [smem:[#allocation3 + %s29]]
        $region44: #{flow_extract_forward.1} parent=39 // pred_fallthru
          _
        // Predicated region
        $region45: #{flow_extract_forward.1} parent=39 // pred_check
          %p284 = pneg %p79
        $region46: #{flow_extract_forward.1} parent=39 // pred_check_branch
          %286 = sbr.rel (%p284) target = $region48
        $region47: #{flow_extract_forward.1} parent=39 // pred_region
          %s287 = sld [smem:[#allocation4 + %s29]]
          %p288 = scmp.lt.s32.totalorder %s287, 3
          %s289 = scalar_select %p288, %s287, 3
          %s290 = smul.addr %s289, 4
          %s291 = smul.addr %s290, 8
          %s292 = scalar_lea.vmem %s3, %s291
          %s293 = sld [smem:[#allocation4 + %s29]]
        $region48: #{flow_extract_forward.1} parent=39 // pred_fallthru
          _
      $region40: #{flow_extract_forward.1} parent=5 // pred_fallthru
        _
      %p294 = scmp.le.s32.totalorder 1, %s29
      %p295 = scmp.lt.s32.totalorder %s29, 3
      %p296 = pnand %p294, %p295
      %p297 = pneg %p296
      // Predicated region
      $region49: #{flow_extract_forward.1} parent=5 // pred_check
        _
      $region50: #{flow_extract_forward.1} parent=5 // pred_check_branch
        %299 = sbr.rel (%p296) target = $region52
      $region51: #{flow_extract_forward.1} parent=5 // pred_region
        %s300 = ssub.s32 %s29, 1
        %s301 = sld [smem:[#allocation3 + %s34]]
        %p302 = scmp.lt.s32.totalorder %s301, 3
        %s303 = scalar_select %p302, %s301, 3
        %s304 = smul.addr %s303, 4
        %s305 = smul.addr %s304, 8
        %s306 = scalar_lea.vmem %s2, %s305
        %p307 = pneg %p57
        %p308 = pneg %p54
        %s309 = sld [smem:[#allocation4 + %s34]]
        %p310 = scmp.lt.s32.totalorder %s309, 3
        %s311 = scalar_select %p310, %s309, 3
        %s312 = smul.addr %s311, 4
        %s313 = smul.addr %s312, 8
        %s314 = scalar_lea.vmem %s3, %s313
        %p315 = pneg %p85
        %p316 = pneg %p82
        %p317 = pneg %p106
        %p318 = pneg %p103
        %p319 = pneg %p127
        %p320 = pneg %p124
        %p321 = pneg %p148
        %p322 = pneg %p145
        %p323 = pneg %p169
        %p324 = pneg %p166
        %p325 = pneg %p190
        %p326 = pneg %p187
        %p327 = pneg %p211
        %p328 = pneg %p208
        %p329 = pneg %p237
        %p330 = pneg %p234
        %s331 = sand.u32 %s224, 1
        %s332 = scalar_lea.sflag [#allocation6], %s331
        %s333 = sand.u32 %s224, 1
        %s334 = smul.addr %s333, 256
        %s335 = scalar_lea.vmem [#allocation5], %s334
        %s336 = sld [smem:[#allocation3 + %s34]]
        %p337 = scmp.lt.s32.totalorder %s336, 3
        %s338 = scalar_select %p337, %s336, 3
        %s339 = smul.addr %s338, 4
        %s340 = smul.addr %s339, 8
        %s341 = scalar_lea.vmem %s2, %s340
        %s342 = sld [smem:[#allocation3 + %s34]]
        %s343 = sld [smem:[#allocation4 + %s34]]
        %p344 = scmp.lt.s32.totalorder %s343, 3
        %s345 = scalar_select %p344, %s343, 3
        %s346 = smul.addr %s345, 4
        %s347 = smul.addr %s346, 8
        %s348 = scalar_lea.vmem %s3, %s347
        %s349 = sld [smem:[#allocation4 + %s34]]
        %v350 = vld [vmem:[%s341] sm:$0xff]
        %v351 = vld [vmem:[%s341 + $0x8] sm:$0xff]
        %v352 = vld [vmem:[%s341 + $0x10] sm:$0xff]
        %v353 = vld [vmem:[%s341 + $0x18] sm:$0xff]
        %v354 = vld [vmem:[%s348] sm:$0xff]
        %v355 = vld [vmem:[%s348 + $0x8] sm:$0xff]
        %v356 = vld [vmem:[%s348 + $0x10] sm:$0xff]
        %v357 = vld [vmem:[%s348 + $0x18] sm:$0xff]
        %v358 = vld [vmem:[%s4] sm:$0xff]
        %v359 = vld [vmem:[%s4 + $0x8] sm:$0xff]
        %v360 = vld [vmem:[%s4 + $0x10] sm:$0xff]
        %v361 = vld [vmem:[%s4 + $0x18] sm:$0xff]
        %v362 = vld [vmem:[%s4 + $0x20] sm:$0xff]
        %v363 = vld [vmem:[%s4 + $0x28] sm:$0xff]
        %v364 = vld [vmem:[%s4 + $0x30] sm:$0xff]
        %v365 = vld [vmem:[%s4 + $0x38] sm:$0xff]
        %v366 = vld [vmem:[%s4 + $0x40] sm:$0xff]
        %v367 = vld [vmem:[%s4 + $0x48] sm:$0xff]
        %v368 = vld [vmem:[%s4 + $0x50] sm:$0xff]
        %v369 = vld [vmem:[%s4 + $0x58] sm:$0xff]
        %v370 = vld [vmem:[%s5] sm:$0xff]
        %v371 = vld [vmem:[%s5 + $0x8] sm:$0xff]
        %v372 = vld [vmem:[%s5 + $0x10] sm:$0xff]
        %v373 = vld [vmem:[%s5 + $0x18] sm:$0xff]
        %v374 = vld [vmem:[%s5 + $0x20] sm:$0xff]
        %v375 = vld [vmem:[%s5 + $0x28] sm:$0xff]
        %v376 = vld [vmem:[%s5 + $0x30] sm:$0xff]
        %v377 = vld [vmem:[%s5 + $0x38] sm:$0xff]
        %v378 = vld [vmem:[%s5 + $0x40] sm:$0xff]
        %v379 = vld [vmem:[%s5 + $0x48] sm:$0xff]
        %v380 = vld [vmem:[%s5 + $0x50] sm:$0xff]
        %v381 = vld [vmem:[%s5 + $0x58] sm:$0xff]
        %vm382 = vcmask 785408
        %v384 = vsel %vm382, %v354, 0
        %v387 = vsel %vm382, %v355, 0
        %v390 = vsel %vm382, %v356, 0
        %v393 = vsel %vm382, %v357, 0
        %395 = vmatprep.subr.mxu0 0.0
        %396 = vmatpush1.msra.mxu0 0.0
        %397 = vmatprep.subr.mxu0 0.0
        %398 = vmatpush1.msra.mxu0 0.0
        %399 = vmatprep.subr.mxu0 0.0
        %400 = vmatpush1.msra.mxu0 0.0
        %401 = vmatprep.subr.mxu0 0.0
        %402 = vmatpush1.msra.mxu0 0.0
        %403 = vmatprep.subr.mxu0 0.0
        %404 = vmatpush1.msra.mxu0 %v381
        %405 = vmatprep.subr.mxu0 0.0
        %406 = vmatpush1.msra.mxu0 %v380
        %407 = vmatprep.subr.mxu0 0.0
        %408 = vmatpush1.msra.mxu0 %v379
        %409 = vmatprep.subr.mxu0 0.0
        %410 = vmatpush1.msra.mxu0 %v378
        %411 = vmatprep.subr.mxu0 0.0
        %412 = vmatpush1.msra.mxu0 %v377
        %413 = vmatprep.subr.mxu0 0.0
        %414 = vmatpush1.msra.mxu0 %v376
        %415 = vmatprep.subr.mxu0 0.0
        %416 = vmatpush1.msra.mxu0 %v375
        %417 = vmatprep.subr.mxu0 0.0
        %418 = vmatpush1.msra.mxu0 %v374
        %419 = vmatprep.subr.mxu0 0.0
        %420 = vmatpush1.msra.mxu0 %v373
        %421 = vmatprep.subr.mxu0 0.0
        %422 = vmatpush1.msra.mxu0 %v372
        %423 = vmatprep.subr.mxu0 0.0
        %424 = vmatpush1.msra.mxu0 %v371
        %425 = vmatprep.subr.mxu0 0.0
        %426 = vmatpush1.msra.mxu0 %v370
        %427 = vmatprep.subr.mxu0 0.0
        %428 = vmatpush2.msra.mxu0 0.0
        %429 = vmatprep.subr.mxu0 0.0
        %430 = vmatpush2.msra.mxu0 0.0
        %431 = vmatprep.subr.mxu0 0.0
        %432 = vmatpush2.msra.mxu0 0.0
        %433 = vmatprep.subr.mxu0 0.0
        %434 = vmatpush2.msra.mxu0 0.0
        %435 = vmatprep.subr.mxu0 0.0
        %436 = vmatpush2.msra.mxu0 0.0
        %437 = vmatprep.subr.mxu0 0.0
        %438 = vmatpush2.msra.mxu0 0.0
        %439 = vmatprep.subr.mxu0 0.0
        %440 = vmatpush2.msra.mxu0 0.0
        %441 = vmatprep.subr.mxu0 0.0
        %442 = vmatpush2.msra.mxu0 0.0
        %443 = vmatprep.subr.mxu0 0.0
        %444 = vmatpush2.msra.mxu0 0.0
        %445 = vmatprep.subr.mxu0 0.0
        %446 = vmatpush2.msra.mxu0 0.0
        %447 = vmatprep.subr.mxu0 0.0
        %448 = vmatpush2.msra.mxu0 0.0
        %449 = vmatprep.subr.mxu0 0.0
        %450 = vmatpush2.msra.mxu0 0.0
        %451 = vmatprep.subr.mxu0 0.0
        %452 = vmatpush2.msra.mxu0 0.0
        %453 = vmatprep.subr.mxu0 0.0
        %454 = vmatpush2.msra.mxu0 0.0
        %455 = vmatprep.subr.mxu0 0.0
        %456 = vmatpush2.msra.mxu0 0.0
        %457 = vmatprep.subr.mxu0 0.0
        %458 = vmatpush2.msra.mxu0 0.0
        %459 = vmatprep.mubr.f32.mxu0 0.0
        %460 = vmatmul.mubr.f32.gmra.mxu0 %v384
        %v461 = vpop.f32.mrf.mxu0
        %v462 = vadd.f32 0.0, %v461
        %v463 = vpop.f32.mrf.mxu0
        %464 = vmatprep.mubr.f32.mxu0 0.0
        %465 = vmatmul.mubr.f32.gmra.mxu0 %v387
        %v466 = vpop.f32.mrf.mxu0
        %v467 = vadd.f32 0.0, %v466
        %v468 = vpop.f32.mrf.mxu0
        %469 = vmatprep.mubr.f32.mxu0 0.0
        %470 = vmatmul.mubr.f32.gmra.mxu0 %v390
        %v471 = vpop.f32.mrf.mxu0
        %v472 = vadd.f32 0.0, %v471
        %v473 = vpop.f32.mrf.mxu0
        %474 = vmatprep.mubr.f32.mxu0 0.0
        %475 = vmatmul.mubr.f32.gmra.mxu0 %v393
        %v476 = vpop.f32.mrf.mxu0
        %v477 = vadd.f32 0.0, %v476
        %v478 = vpop.f32.mrf.mxu0
        %479 = vdwg.mxu0
        %v481 = vsel %vm382, %v350, 0
        %v484 = vsel %vm382, %v351, 0
        %v487 = vsel %vm382, %v352, 0
        %v490 = vsel %vm382, %v353, 0
        %492 = vmatprep.subr.mxu0 0.0
        %493 = vmatpush1.msra.mxu0 0.0
        %494 = vmatprep.subr.mxu0 0.0
        %495 = vmatpush1.msra.mxu0 0.0
        %496 = vmatprep.subr.mxu0 0.0
        %497 = vmatpush1.msra.mxu0 0.0
        %498 = vmatprep.subr.mxu0 0.0
        %499 = vmatpush1.msra.mxu0 0.0
        %500 = vmatprep.subr.mxu0 0.0
        %501 = vmatpush1.msra.mxu0 %v369
        %502 = vmatprep.subr.mxu0 0.0
        %503 = vmatpush1.msra.mxu0 %v368
        %504 = vmatprep.subr.mxu0 0.0
        %505 = vmatpush1.msra.mxu0 %v367
        %506 = vmatprep.subr.mxu0 0.0
        %507 = vmatpush1.msra.mxu0 %v366
        %508 = vmatprep.subr.mxu0 0.0
        %509 = vmatpush1.msra.mxu0 %v365
        %510 = vmatprep.subr.mxu0 0.0
        %511 = vmatpush1.msra.mxu0 %v364
        %512 = vmatprep.subr.mxu0 0.0
        %513 = vmatpush1.msra.mxu0 %v363
        %514 = vmatprep.subr.mxu0 0.0
        %515 = vmatpush1.msra.mxu0 %v362
        %516 = vmatprep.subr.mxu0 0.0
        %517 = vmatpush1.msra.mxu0 %v361
        %518 = vmatprep.subr.mxu0 0.0
        %519 = vmatpush1.msra.mxu0 %v360
        %520 = vmatprep.subr.mxu0 0.0
        %521 = vmatpush1.msra.mxu0 %v359
        %522 = vmatprep.subr.mxu0 0.0
        %523 = vmatpush1.msra.mxu0 %v358
        %524 = vmatprep.subr.mxu0 0.0
        %525 = vmatpush2.msra.mxu0 0.0
        %526 = vmatprep.subr.mxu0 0.0
        %527 = vmatpush2.msra.mxu0 0.0
        %528 = vmatprep.subr.mxu0 0.0
        %529 = vmatpush2.msra.mxu0 0.0
        %530 = vmatprep.subr.mxu0 0.0
        %531 = vmatpush2.msra.mxu0 0.0
        %532 = vmatprep.subr.mxu0 0.0
        %533 = vmatpush2.msra.mxu0 0.0
        %534 = vmatprep.subr.mxu0 0.0
        %535 = vmatpush2.msra.mxu0 0.0
        %536 = vmatprep.subr.mxu0 0.0
        %537 = vmatpush2.msra.mxu0 0.0
        %538 = vmatprep.subr.mxu0 0.0
        %539 = vmatpush2.msra.mxu0 0.0
        %540 = vmatprep.subr.mxu0 0.0
        %541 = vmatpush2.msra.mxu0 0.0
        %542 = vmatprep.subr.mxu0 0.0
        %543 = vmatpush2.msra.mxu0 0.0
        %544 = vmatprep.subr.mxu0 0.0
        %545 = vmatpush2.msra.mxu0 0.0
        %546 = vmatprep.subr.mxu0 0.0
        %547 = vmatpush2.msra.mxu0 0.0
        %548 = vmatprep.subr.mxu0 0.0
        %549 = vmatpush2.msra.mxu0 0.0
        %550 = vmatprep.subr.mxu0 0.0
        %551 = vmatpush2.msra.mxu0 0.0
        %552 = vmatprep.subr.mxu0 0.0
        %553 = vmatpush2.msra.mxu0 0.0
        %554 = vmatprep.subr.mxu0 0.0
        %555 = vmatpush2.msra.mxu0 0.0
        %556 = vmatprep.mubr.f32.mxu0 0.0
        %557 = vmatmul.mubr.f32.gmra.mxu0 %v481
        %v558 = vpop.f32.mrf.mxu0
        %v559 = vadd.f32 %v462, %v558
        %v560 = vpop.f32.mrf.mxu0
        %561 = vmatprep.mubr.f32.mxu0 0.0
        %562 = vmatmul.mubr.f32.gmra.mxu0 %v484
        %v563 = vpop.f32.mrf.mxu0
        %v564 = vadd.f32 %v467, %v563
        %v565 = vpop.f32.mrf.mxu0
        %566 = vmatprep.mubr.f32.mxu0 0.0
        %567 = vmatmul.mubr.f32.gmra.mxu0 %v487
        %v568 = vpop.f32.mrf.mxu0
        %v569 = vadd.f32 %v472, %v568
        %v570 = vpop.f32.mrf.mxu0
        %571 = vmatprep.mubr.f32.mxu0 0.0
        %572 = vmatmul.mubr.f32.gmra.mxu0 %v490
        %v573 = vpop.f32.mrf.mxu0
        %v574 = vadd.f32 %v477, %v573
        %v575 = vpop.f32.mrf.mxu0
        %576 = vdwg.mxu0
        %v577 = vld [vmem:[%s6] sm:$0xf]
        %s578 = scalar_lea.vmem %s6, 4
        %v579 = vld [vmem:[%s578] sm:$0xf]
        %584 = vrot.lane.b32.xlu0 %v559, 120
        %v585 = vpop.permute.xlu0 %584
        %586 = vrot.lane.b32.xlu0 %v564, 120
        %v587 = vpop.permute.xlu0 %586
        %588 = vrot.lane.b32.xlu0 %v569, 120
        %v589 = vpop.permute.xlu0 %588
        %590 = vrot.lane.b32.xlu0 %v574, 120
        %v591 = vpop.permute.xlu0 %590
        %vm596 = vcmask 261120
        %v598 = vsel %vm596, %v579, 0
        %600 = vmatprep.subr.mxu0 0.0
        %601 = vmatpush1.msra.mxu0 0.0
        %602 = vmatprep.subr.mxu0 0.0
        %603 = vmatpush1.msra.mxu0 0.0
        %604 = vmatprep.subr.mxu0 0.0
        %605 = vmatpush1.msra.mxu0 0.0
        %606 = vmatprep.subr.mxu0 0.0
        %607 = vmatpush1.msra.mxu0 0.0
        %608 = vmatprep.subr.mxu0 0.0
        %609 = vmatpush1.msra.mxu0 0.0
        %610 = vmatprep.subr.mxu0 0.0
        %611 = vmatpush1.msra.mxu0 0.0
        %612 = vmatprep.subr.mxu0 0.0
        %613 = vmatpush1.msra.mxu0 0.0
        %614 = vmatprep.subr.mxu0 0.0
        %615 = vmatpush1.msra.mxu0 0.0
        %616 = vmatprep.subr.mxu0 0.0
        %617 = vmatpush1.msra.mxu0 0.0
        %618 = vmatprep.subr.mxu0 0.0
        %619 = vmatpush1.msra.mxu0 0.0
        %620 = vmatprep.subr.mxu0 0.0
        %621 = vmatpush1.msra.mxu0 0.0
        %622 = vmatprep.subr.mxu0 0.0
        %623 = vmatpush1.msra.mxu0 0.0
        %624 = vmatprep.subr.mxu0 0.0
        %625 = vmatpush1.msra.mxu0 %v591
        %626 = vmatprep.subr.mxu0 0.0
        %627 = vmatpush1.msra.mxu0 %v589
        %628 = vmatprep.subr.mxu0 0.0
        %629 = vmatpush1.msra.mxu0 %v587
        %630 = vmatprep.subr.mxu0 0.0
        %631 = vmatpush1.msra.mxu0 %v585
        %632 = vmatprep.subr.mxu0 0.0
        %633 = vmatpush2.msra.mxu0 0.0
        %634 = vmatprep.subr.mxu0 0.0
        %635 = vmatpush2.msra.mxu0 0.0
        %636 = vmatprep.subr.mxu0 0.0
        %637 = vmatpush2.msra.mxu0 0.0
        %638 = vmatprep.subr.mxu0 0.0
        %639 = vmatpush2.msra.mxu0 0.0
        %640 = vmatprep.subr.mxu0 0.0
        %641 = vmatpush2.msra.mxu0 0.0
        %642 = vmatprep.subr.mxu0 0.0
        %643 = vmatpush2.msra.mxu0 0.0
        %644 = vmatprep.subr.mxu0 0.0
        %645 = vmatpush2.msra.mxu0 0.0
        %646 = vmatprep.subr.mxu0 0.0
        %647 = vmatpush2.msra.mxu0 0.0
        %648 = vmatprep.subr.mxu0 0.0
        %649 = vmatpush2.msra.mxu0 0.0
        %650 = vmatprep.subr.mxu0 0.0
        %651 = vmatpush2.msra.mxu0 0.0
        %652 = vmatprep.subr.mxu0 0.0
        %653 = vmatpush2.msra.mxu0 0.0
        %654 = vmatprep.subr.mxu0 0.0
        %655 = vmatpush2.msra.mxu0 0.0
        %656 = vmatprep.subr.mxu0 0.0
        %657 = vmatpush2.msra.mxu0 0.0
        %658 = vmatprep.subr.mxu0 0.0
        %659 = vmatpush2.msra.mxu0 0.0
        %660 = vmatprep.subr.mxu0 0.0
        %661 = vmatpush2.msra.mxu0 0.0
        %662 = vmatprep.subr.mxu0 0.0
        %663 = vmatpush2.msra.mxu0 0.0
        %664 = vmatprep.mubr.f32.mxu0 0.0
        %665 = vmatmul.mubr.f32.gmra.mxu0 %v598
        %v666 = vpop.f32.mrf.mxu0
        %v667 = vadd.f32 0.0, %v666
        %v668 = vpop.f32.mrf.mxu0
        %669 = vdwg.mxu0
        %v671 = vsel %vm596, %v577, 0
        %673 = vmatprep.subr.mxu0 0.0
        %674 = vmatpush1.msra.mxu0 0.0
        %675 = vmatprep.subr.mxu0 0.0
        %676 = vmatpush1.msra.mxu0 0.0
        %677 = vmatprep.subr.mxu0 0.0
        %678 = vmatpush1.msra.mxu0 0.0
        %679 = vmatprep.subr.mxu0 0.0
        %680 = vmatpush1.msra.mxu0 0.0
        %681 = vmatprep.subr.mxu0 0.0
        %682 = vmatpush1.msra.mxu0 0.0
        %683 = vmatprep.subr.mxu0 0.0
        %684 = vmatpush1.msra.mxu0 0.0
        %685 = vmatprep.subr.mxu0 0.0
        %686 = vmatpush1.msra.mxu0 0.0
        %687 = vmatprep.subr.mxu0 0.0
        %688 = vmatpush1.msra.mxu0 0.0
        %689 = vmatprep.subr.mxu0 0.0
        %690 = vmatpush1.msra.mxu0 0.0
        %691 = vmatprep.subr.mxu0 0.0
        %692 = vmatpush1.msra.mxu0 0.0
        %693 = vmatprep.subr.mxu0 0.0
        %694 = vmatpush1.msra.mxu0 0.0
        %695 = vmatprep.subr.mxu0 0.0
        %696 = vmatpush1.msra.mxu0 0.0
        %697 = vmatprep.subr.mxu0 0.0
        %698 = vmatpush1.msra.mxu0 %v574
        %699 = vmatprep.subr.mxu0 0.0
        %700 = vmatpush1.msra.mxu0 %v569
        %701 = vmatprep.subr.mxu0 0.0
        %702 = vmatpush1.msra.mxu0 %v564
        %703 = vmatprep.subr.mxu0 0.0
        %704 = vmatpush1.msra.mxu0 %v559
        %705 = vmatprep.subr.mxu0 0.0
        %706 = vmatpush2.msra.mxu0 0.0
        %707 = vmatprep.subr.mxu0 0.0
        %708 = vmatpush2.msra.mxu0 0.0
        %709 = vmatprep.subr.mxu0 0.0
        %710 = vmatpush2.msra.mxu0 0.0
        %711 = vmatprep.subr.mxu0 0.0
        %712 = vmatpush2.msra.mxu0 0.0
        %713 = vmatprep.subr.mxu0 0.0
        %714 = vmatpush2.msra.mxu0 0.0
        %715 = vmatprep.subr.mxu0 0.0
        %716 = vmatpush2.msra.mxu0 0.0
        %717 = vmatprep.subr.mxu0 0.0
        %718 = vmatpush2.msra.mxu0 0.0
        %719 = vmatprep.subr.mxu0 0.0
        %720 = vmatpush2.msra.mxu0 0.0
        %721 = vmatprep.subr.mxu0 0.0
        %722 = vmatpush2.msra.mxu0 0.0
        %723 = vmatprep.subr.mxu0 0.0
        %724 = vmatpush2.msra.mxu0 0.0
        %725 = vmatprep.subr.mxu0 0.0
        %726 = vmatpush2.msra.mxu0 0.0
        %727 = vmatprep.subr.mxu0 0.0
        %728 = vmatpush2.msra.mxu0 0.0
        %729 = vmatprep.subr.mxu0 0.0
        %730 = vmatpush2.msra.mxu0 0.0
        %731 = vmatprep.subr.mxu0 0.0
        %732 = vmatpush2.msra.mxu0 0.0
        %733 = vmatprep.subr.mxu0 0.0
        %734 = vmatpush2.msra.mxu0 0.0
        %735 = vmatprep.subr.mxu0 0.0
        %736 = vmatpush2.msra.mxu0 0.0
        %737 = vmatprep.mubr.f32.mxu0 0.0
        %738 = vmatmul.mubr.f32.gmra.mxu0 %v671
        %v739 = vpop.f32.mrf.mxu0
        %v740 = vadd.f32 %v667, %v739
        %v741 = vpop.f32.mrf.mxu0
        %742 = vdwg.mxu0
        %s743 = scalar_lea.vmem %s6, 8
        %v744 = vld [vmem:[%s743] sm:$0xf]
        %745 = vrot.lane.b32.xlu0 %v559, 112
        %v746 = vpop.permute.xlu0 %745
        %747 = vrot.lane.b32.xlu0 %v564, 112
        %v748 = vpop.permute.xlu0 %747
        %749 = vrot.lane.b32.xlu0 %v569, 112
        %v750 = vpop.permute.xlu0 %749
        %751 = vrot.lane.b32.xlu0 %v574, 112
        %v752 = vpop.permute.xlu0 %751
        %v758 = vsel %vm596, %v744, 0
        %760 = vmatprep.subr.mxu0 0.0
        %761 = vmatpush1.msra.mxu0 0.0
        %762 = vmatprep.subr.mxu0 0.0
        %763 = vmatpush1.msra.mxu0 0.0
        %764 = vmatprep.subr.mxu0 0.0
        %765 = vmatpush1.msra.mxu0 0.0
        %766 = vmatprep.subr.mxu0 0.0
        %767 = vmatpush1.msra.mxu0 0.0
        %768 = vmatprep.subr.mxu0 0.0
        %769 = vmatpush1.msra.mxu0 0.0
        %770 = vmatprep.subr.mxu0 0.0
        %771 = vmatpush1.msra.mxu0 0.0
        %772 = vmatprep.subr.mxu0 0.0
        %773 = vmatpush1.msra.mxu0 0.0
        %774 = vmatprep.subr.mxu0 0.0
        %775 = vmatpush1.msra.mxu0 0.0
        %776 = vmatprep.subr.mxu0 0.0
        %777 = vmatpush1.msra.mxu0 0.0
        %778 = vmatprep.subr.mxu0 0.0
        %779 = vmatpush1.msra.mxu0 0.0
        %780 = vmatprep.subr.mxu0 0.0
        %781 = vmatpush1.msra.mxu0 0.0
        %782 = vmatprep.subr.mxu0 0.0
        %783 = vmatpush1.msra.mxu0 0.0
        %784 = vmatprep.subr.mxu0 0.0
        %785 = vmatpush1.msra.mxu0 %v752
        %786 = vmatprep.subr.mxu0 0.0
        %787 = vmatpush1.msra.mxu0 %v750
        %788 = vmatprep.subr.mxu0 0.0
        %789 = vmatpush1.msra.mxu0 %v748
        %790 = vmatprep.subr.mxu0 0.0
        %791 = vmatpush1.msra.mxu0 %v746
        %792 = vmatprep.subr.mxu0 0.0
        %793 = vmatpush2.msra.mxu0 0.0
        %794 = vmatprep.subr.mxu0 0.0
        %795 = vmatpush2.msra.mxu0 0.0
        %796 = vmatprep.subr.mxu0 0.0
        %797 = vmatpush2.msra.mxu0 0.0
        %798 = vmatprep.subr.mxu0 0.0
        %799 = vmatpush2.msra.mxu0 0.0
        %800 = vmatprep.subr.mxu0 0.0
        %801 = vmatpush2.msra.mxu0 0.0
        %802 = vmatprep.subr.mxu0 0.0
        %803 = vmatpush2.msra.mxu0 0.0
        %804 = vmatprep.subr.mxu0 0.0
        %805 = vmatpush2.msra.mxu0 0.0
        %806 = vmatprep.subr.mxu0 0.0
        %807 = vmatpush2.msra.mxu0 0.0
        %808 = vmatprep.subr.mxu0 0.0
        %809 = vmatpush2.msra.mxu0 0.0
        %810 = vmatprep.subr.mxu0 0.0
        %811 = vmatpush2.msra.mxu0 0.0
        %812 = vmatprep.subr.mxu0 0.0
        %813 = vmatpush2.msra.mxu0 0.0
        %814 = vmatprep.subr.mxu0 0.0
        %815 = vmatpush2.msra.mxu0 0.0
        %816 = vmatprep.subr.mxu0 0.0
        %817 = vmatpush2.msra.mxu0 0.0
        %818 = vmatprep.subr.mxu0 0.0
        %819 = vmatpush2.msra.mxu0 0.0
        %820 = vmatprep.subr.mxu0 0.0
        %821 = vmatpush2.msra.mxu0 0.0
        %822 = vmatprep.subr.mxu0 0.0
        %823 = vmatpush2.msra.mxu0 0.0
        %824 = vmatprep.mubr.f32.mxu0 0.0
        %825 = vmatmul.mubr.f32.gmra.mxu0 %v758
        %v826 = vpop.f32.mrf.mxu0
        %v827 = vadd.f32 0.0, %v826
        %v828 = vpop.f32.mrf.mxu0
        %829 = vdwg.mxu0
        %v830 = vadd.f32 %v740, %v827
        %s831 = scalar_lea.vmem %s6, 12
        %v832 = vld [vmem:[%s831] sm:$0xf]
        %833 = vrot.lane.b32.xlu0 %v559, 104
        %v834 = vpop.permute.xlu0 %833
        %835 = vrot.lane.b32.xlu0 %v564, 104
        %v836 = vpop.permute.xlu0 %835
        %837 = vrot.lane.b32.xlu0 %v569, 104
        %v838 = vpop.permute.xlu0 %837
        %839 = vrot.lane.b32.xlu0 %v574, 104
        %v840 = vpop.permute.xlu0 %839
        %v846 = vsel %vm596, %v832, 0
        %848 = vmatprep.subr.mxu0 0.0
        %849 = vmatpush1.msra.mxu0 0.0
        %850 = vmatprep.subr.mxu0 0.0
        %851 = vmatpush1.msra.mxu0 0.0
        %852 = vmatprep.subr.mxu0 0.0
        %853 = vmatpush1.msra.mxu0 0.0
        %854 = vmatprep.subr.mxu0 0.0
        %855 = vmatpush1.msra.mxu0 0.0
        %856 = vmatprep.subr.mxu0 0.0
        %857 = vmatpush1.msra.mxu0 0.0
        %858 = vmatprep.subr.mxu0 0.0
        %859 = vmatpush1.msra.mxu0 0.0
        %860 = vmatprep.subr.mxu0 0.0
        %861 = vmatpush1.msra.mxu0 0.0
        %862 = vmatprep.subr.mxu0 0.0
        %863 = vmatpush1.msra.mxu0 0.0
        %864 = vmatprep.subr.mxu0 0.0
        %865 = vmatpush1.msra.mxu0 0.0
        %866 = vmatprep.subr.mxu0 0.0
        %867 = vmatpush1.msra.mxu0 0.0
        %868 = vmatprep.subr.mxu0 0.0
        %869 = vmatpush1.msra.mxu0 0.0
        %870 = vmatprep.subr.mxu0 0.0
        %871 = vmatpush1.msra.mxu0 0.0
        %872 = vmatprep.subr.mxu0 0.0
        %873 = vmatpush1.msra.mxu0 %v840
        %874 = vmatprep.subr.mxu0 0.0
        %875 = vmatpush1.msra.mxu0 %v838
        %876 = vmatprep.subr.mxu0 0.0
        %877 = vmatpush1.msra.mxu0 %v836
        %878 = vmatprep.subr.mxu0 0.0
        %879 = vmatpush1.msra.mxu0 %v834
        %880 = vmatprep.subr.mxu0 0.0
        %881 = vmatpush2.msra.mxu0 0.0
        %882 = vmatprep.subr.mxu0 0.0
        %883 = vmatpush2.msra.mxu0 0.0
        %884 = vmatprep.subr.mxu0 0.0
        %885 = vmatpush2.msra.mxu0 0.0
        %886 = vmatprep.subr.mxu0 0.0
        %887 = vmatpush2.msra.mxu0 0.0
        %888 = vmatprep.subr.mxu0 0.0
        %889 = vmatpush2.msra.mxu0 0.0
        %890 = vmatprep.subr.mxu0 0.0
        %891 = vmatpush2.msra.mxu0 0.0
        %892 = vmatprep.subr.mxu0 0.0
        %893 = vmatpush2.msra.mxu0 0.0
        %894 = vmatprep.subr.mxu0 0.0
        %895 = vmatpush2.msra.mxu0 0.0
        %896 = vmatprep.subr.mxu0 0.0
        %897 = vmatpush2.msra.mxu0 0.0
        %898 = vmatprep.subr.mxu0 0.0
        %899 = vmatpush2.msra.mxu0 0.0
        %900 = vmatprep.subr.mxu0 0.0
        %901 = vmatpush2.msra.mxu0 0.0
        %902 = vmatprep.subr.mxu0 0.0
        %903 = vmatpush2.msra.mxu0 0.0
        %904 = vmatprep.subr.mxu0 0.0
        %905 = vmatpush2.msra.mxu0 0.0
        %906 = vmatprep.subr.mxu0 0.0
        %907 = vmatpush2.msra.mxu0 0.0
        %908 = vmatprep.subr.mxu0 0.0
        %909 = vmatpush2.msra.mxu0 0.0
        %910 = vmatprep.subr.mxu0 0.0
        %911 = vmatpush2.msra.mxu0 0.0
        %912 = vmatprep.mubr.f32.mxu0 0.0
        %913 = vmatmul.mubr.f32.gmra.mxu0 %v846
        %v914 = vpop.f32.mrf.mxu0
        %v915 = vadd.f32 0.0, %v914
        %v916 = vpop.f32.mrf.mxu0
        %917 = vdwg.mxu0
        %v918 = vadd.f32 %v830, %v915
        %s919 = scalar_lea.vmem %s6, 16
        %v920 = vld [vmem:[%s919] sm:$0xf]
        %921 = vrot.lane.b32.xlu0 %v559, 96
        %v922 = vpop.permute.xlu0 %921
        %923 = vrot.lane.b32.xlu0 %v564, 96
        %v924 = vpop.permute.xlu0 %923
        %925 = vrot.lane.b32.xlu0 %v569, 96
        %v926 = vpop.permute.xlu0 %925
        %927 = vrot.lane.b32.xlu0 %v574, 96
        %v928 = vpop.permute.xlu0 %927
        %v934 = vsel %vm596, %v920, 0
        %936 = vmatprep.subr.mxu0 0.0
        %937 = vmatpush1.msra.mxu0 0.0
        %938 = vmatprep.subr.mxu0 0.0
        %939 = vmatpush1.msra.mxu0 0.0
        %940 = vmatprep.subr.mxu0 0.0
        %941 = vmatpush1.msra.mxu0 0.0
        %942 = vmatprep.subr.mxu0 0.0
        %943 = vmatpush1.msra.mxu0 0.0
        %944 = vmatprep.subr.mxu0 0.0
        %945 = vmatpush1.msra.mxu0 0.0
        %946 = vmatprep.subr.mxu0 0.0
        %947 = vmatpush1.msra.mxu0 0.0
        %948 = vmatprep.subr.mxu0 0.0
        %949 = vmatpush1.msra.mxu0 0.0
        %950 = vmatprep.subr.mxu0 0.0
        %951 = vmatpush1.msra.mxu0 0.0
        %952 = vmatprep.subr.mxu0 0.0
        %953 = vmatpush1.msra.mxu0 0.0
        %954 = vmatprep.subr.mxu0 0.0
        %955 = vmatpush1.msra.mxu0 0.0
        %956 = vmatprep.subr.mxu0 0.0
        %957 = vmatpush1.msra.mxu0 0.0
        %958 = vmatprep.subr.mxu0 0.0
        %959 = vmatpush1.msra.mxu0 0.0
        %960 = vmatprep.subr.mxu0 0.0
        %961 = vmatpush1.msra.mxu0 %v928
        %962 = vmatprep.subr.mxu0 0.0
        %963 = vmatpush1.msra.mxu0 %v926
        %964 = vmatprep.subr.mxu0 0.0
        %965 = vmatpush1.msra.mxu0 %v924
        %966 = vmatprep.subr.mxu0 0.0
        %967 = vmatpush1.msra.mxu0 %v922
        %968 = vmatprep.subr.mxu0 0.0
        %969 = vmatpush2.msra.mxu0 0.0
        %970 = vmatprep.subr.mxu0 0.0
        %971 = vmatpush2.msra.mxu0 0.0
        %972 = vmatprep.subr.mxu0 0.0
        %973 = vmatpush2.msra.mxu0 0.0
        %974 = vmatprep.subr.mxu0 0.0
        %975 = vmatpush2.msra.mxu0 0.0
        %976 = vmatprep.subr.mxu0 0.0
        %977 = vmatpush2.msra.mxu0 0.0
        %978 = vmatprep.subr.mxu0 0.0
        %979 = vmatpush2.msra.mxu0 0.0
        %980 = vmatprep.subr.mxu0 0.0
        %981 = vmatpush2.msra.mxu0 0.0
        %982 = vmatprep.subr.mxu0 0.0
        %983 = vmatpush2.msra.mxu0 0.0
        %984 = vmatprep.subr.mxu0 0.0
        %985 = vmatpush2.msra.mxu0 0.0
        %986 = vmatprep.subr.mxu0 0.0
        %987 = vmatpush2.msra.mxu0 0.0
        %988 = vmatprep.subr.mxu0 0.0
        %989 = vmatpush2.msra.mxu0 0.0
        %990 = vmatprep.subr.mxu0 0.0
        %991 = vmatpush2.msra.mxu0 0.0
        %992 = vmatprep.subr.mxu0 0.0
        %993 = vmatpush2.msra.mxu0 0.0
        %994 = vmatprep.subr.mxu0 0.0
        %995 = vmatpush2.msra.mxu0 0.0
        %996 = vmatprep.subr.mxu0 0.0
        %997 = vmatpush2.msra.mxu0 0.0
        %998 = vmatprep.subr.mxu0 0.0
        %999 = vmatpush2.msra.mxu0 0.0
        %1000 = vmatprep.mubr.f32.mxu0 0.0
        %1001 = vmatmul.mubr.f32.gmra.mxu0 %v934
        %v1002 = vpop.f32.mrf.mxu0
        %v1003 = vadd.f32 0.0, %v1002
        %v1004 = vpop.f32.mrf.mxu0
        %1005 = vdwg.mxu0
        %v1006 = vadd.f32 %v918, %v1003
        %s1007 = scalar_lea.vmem %s6, 20
        %v1008 = vld [vmem:[%s1007] sm:$0xf]
        %1009 = vrot.lane.b32.xlu0 %v559, 88
        %v1010 = vpop.permute.xlu0 %1009
        %1011 = vrot.lane.b32.xlu0 %v564, 88
        %v1012 = vpop.permute.xlu0 %1011
        %1013 = vrot.lane.b32.xlu0 %v569, 88
        %v1014 = vpop.permute.xlu0 %1013
        %1015 = vrot.lane.b32.xlu0 %v574, 88
        %v1016 = vpop.permute.xlu0 %1015
        %v1022 = vsel %vm596, %v1008, 0
        %1024 = vmatprep.subr.mxu0 0.0
        %1025 = vmatpush1.msra.mxu0 0.0
        %1026 = vmatprep.subr.mxu0 0.0
        %1027 = vmatpush1.msra.mxu0 0.0
        %1028 = vmatprep.subr.mxu0 0.0
        %1029 = vmatpush1.msra.mxu0 0.0
        %1030 = vmatprep.subr.mxu0 0.0
        %1031 = vmatpush1.msra.mxu0 0.0
        %1032 = vmatprep.subr.mxu0 0.0
        %1033 = vmatpush1.msra.mxu0 0.0
        %1034 = vmatprep.subr.mxu0 0.0
        %1035 = vmatpush1.msra.mxu0 0.0
        %1036 = vmatprep.subr.mxu0 0.0
        %1037 = vmatpush1.msra.mxu0 0.0
        %1038 = vmatprep.subr.mxu0 0.0
        %1039 = vmatpush1.msra.mxu0 0.0
        %1040 = vmatprep.subr.mxu0 0.0
        %1041 = vmatpush1.msra.mxu0 0.0
        %1042 = vmatprep.subr.mxu0 0.0
        %1043 = vmatpush1.msra.mxu0 0.0
        %1044 = vmatprep.subr.mxu0 0.0
        %1045 = vmatpush1.msra.mxu0 0.0
        %1046 = vmatprep.subr.mxu0 0.0
        %1047 = vmatpush1.msra.mxu0 0.0
        %1048 = vmatprep.subr.mxu0 0.0
        %1049 = vmatpush1.msra.mxu0 %v1016
        %1050 = vmatprep.subr.mxu0 0.0
        %1051 = vmatpush1.msra.mxu0 %v1014
        %1052 = vmatprep.subr.mxu0 0.0
        %1053 = vmatpush1.msra.mxu0 %v1012
        %1054 = vmatprep.subr.mxu0 0.0
        %1055 = vmatpush1.msra.mxu0 %v1010
        %1056 = vmatprep.subr.mxu0 0.0
        %1057 = vmatpush2.msra.mxu0 0.0
        %1058 = vmatprep.subr.mxu0 0.0
        %1059 = vmatpush2.msra.mxu0 0.0
        %1060 = vmatprep.subr.mxu0 0.0
        %1061 = vmatpush2.msra.mxu0 0.0
        %1062 = vmatprep.subr.mxu0 0.0
        %1063 = vmatpush2.msra.mxu0 0.0
        %1064 = vmatprep.subr.mxu0 0.0
        %1065 = vmatpush2.msra.mxu0 0.0
        %1066 = vmatprep.subr.mxu0 0.0
        %1067 = vmatpush2.msra.mxu0 0.0
        %1068 = vmatprep.subr.mxu0 0.0
        %1069 = vmatpush2.msra.mxu0 0.0
        %1070 = vmatprep.subr.mxu0 0.0
        %1071 = vmatpush2.msra.mxu0 0.0
        %1072 = vmatprep.subr.mxu0 0.0
        %1073 = vmatpush2.msra.mxu0 0.0
        %1074 = vmatprep.subr.mxu0 0.0
        %1075 = vmatpush2.msra.mxu0 0.0
        %1076 = vmatprep.subr.mxu0 0.0
        %1077 = vmatpush2.msra.mxu0 0.0
        %1078 = vmatprep.subr.mxu0 0.0
        %1079 = vmatpush2.msra.mxu0 0.0
        %1080 = vmatprep.subr.mxu0 0.0
        %1081 = vmatpush2.msra.mxu0 0.0
        %1082 = vmatprep.subr.mxu0 0.0
        %1083 = vmatpush2.msra.mxu0 0.0
        %1084 = vmatprep.subr.mxu0 0.0
        %1085 = vmatpush2.msra.mxu0 0.0
        %1086 = vmatprep.subr.mxu0 0.0
        %1087 = vmatpush2.msra.mxu0 0.0
        %1088 = vmatprep.mubr.f32.mxu0 0.0
        %1089 = vmatmul.mubr.f32.gmra.mxu0 %v1022
        %v1090 = vpop.f32.mrf.mxu0
        %v1091 = vadd.f32 0.0, %v1090
        %v1092 = vpop.f32.mrf.mxu0
        %1093 = vdwg.mxu0
        %v1094 = vadd.f32 %v1006, %v1091
        %s1095 = scalar_lea.vmem %s6, 24
        %v1096 = vld [vmem:[%s1095] sm:$0xf]
        %1097 = vrot.lane.b32.xlu0 %v559, 80
        %v1098 = vpop.permute.xlu0 %1097
        %1099 = vrot.lane.b32.xlu0 %v564, 80
        %v1100 = vpop.permute.xlu0 %1099
        %1101 = vrot.lane.b32.xlu0 %v569, 80
        %v1102 = vpop.permute.xlu0 %1101
        %1103 = vrot.lane.b32.xlu0 %v574, 80
        %v1104 = vpop.permute.xlu0 %1103
        %v1110 = vsel %vm596, %v1096, 0
        %1112 = vmatprep.subr.mxu0 0.0
        %1113 = vmatpush1.msra.mxu0 0.0
        %1114 = vmatprep.subr.mxu0 0.0
        %1115 = vmatpush1.msra.mxu0 0.0
        %1116 = vmatprep.subr.mxu0 0.0
        %1117 = vmatpush1.msra.mxu0 0.0
        %1118 = vmatprep.subr.mxu0 0.0
        %1119 = vmatpush1.msra.mxu0 0.0
        %1120 = vmatprep.subr.mxu0 0.0
        %1121 = vmatpush1.msra.mxu0 0.0
        %1122 = vmatprep.subr.mxu0 0.0
        %1123 = vmatpush1.msra.mxu0 0.0
        %1124 = vmatprep.subr.mxu0 0.0
        %1125 = vmatpush1.msra.mxu0 0.0
        %1126 = vmatprep.subr.mxu0 0.0
        %1127 = vmatpush1.msra.mxu0 0.0
        %1128 = vmatprep.subr.mxu0 0.0
        %1129 = vmatpush1.msra.mxu0 0.0
        %1130 = vmatprep.subr.mxu0 0.0
        %1131 = vmatpush1.msra.mxu0 0.0
        %1132 = vmatprep.subr.mxu0 0.0
        %1133 = vmatpush1.msra.mxu0 0.0
        %1134 = vmatprep.subr.mxu0 0.0
        %1135 = vmatpush1.msra.mxu0 0.0
        %1136 = vmatprep.subr.mxu0 0.0
        %1137 = vmatpush1.msra.mxu0 %v1104
        %1138 = vmatprep.subr.mxu0 0.0
        %1139 = vmatpush1.msra.mxu0 %v1102
        %1140 = vmatprep.subr.mxu0 0.0
        %1141 = vmatpush1.msra.mxu0 %v1100
        %1142 = vmatprep.subr.mxu0 0.0
        %1143 = vmatpush1.msra.mxu0 %v1098
        %1144 = vmatprep.subr.mxu0 0.0
        %1145 = vmatpush2.msra.mxu0 0.0
        %1146 = vmatprep.subr.mxu0 0.0
        %1147 = vmatpush2.msra.mxu0 0.0
        %1148 = vmatprep.subr.mxu0 0.0
        %1149 = vmatpush2.msra.mxu0 0.0
        %1150 = vmatprep.subr.mxu0 0.0
        %1151 = vmatpush2.msra.mxu0 0.0
        %1152 = vmatprep.subr.mxu0 0.0
        %1153 = vmatpush2.msra.mxu0 0.0
        %1154 = vmatprep.subr.mxu0 0.0
        %1155 = vmatpush2.msra.mxu0 0.0
        %1156 = vmatprep.subr.mxu0 0.0
        %1157 = vmatpush2.msra.mxu0 0.0
        %1158 = vmatprep.subr.mxu0 0.0
        %1159 = vmatpush2.msra.mxu0 0.0
        %1160 = vmatprep.subr.mxu0 0.0
        %1161 = vmatpush2.msra.mxu0 0.0
        %1162 = vmatprep.subr.mxu0 0.0
        %1163 = vmatpush2.msra.mxu0 0.0
        %1164 = vmatprep.subr.mxu0 0.0
        %1165 = vmatpush2.msra.mxu0 0.0
        %1166 = vmatprep.subr.mxu0 0.0
        %1167 = vmatpush2.msra.mxu0 0.0
        %1168 = vmatprep.subr.mxu0 0.0
        %1169 = vmatpush2.msra.mxu0 0.0
        %1170 = vmatprep.subr.mxu0 0.0
        %1171 = vmatpush2.msra.mxu0 0.0
        %1172 = vmatprep.subr.mxu0 0.0
        %1173 = vmatpush2.msra.mxu0 0.0
        %1174 = vmatprep.subr.mxu0 0.0
        %1175 = vmatpush2.msra.mxu0 0.0
        %1176 = vmatprep.mubr.f32.mxu0 0.0
        %1177 = vmatmul.mubr.f32.gmra.mxu0 %v1110
        %v1178 = vpop.f32.mrf.mxu0
        %v1179 = vadd.f32 0.0, %v1178
        %v1180 = vpop.f32.mrf.mxu0
        %1181 = vdwg.mxu0
        %v1182 = vadd.f32 %v1094, %v1179
        %s1183 = scalar_lea.vmem %s6, 28
        %v1184 = vld [vmem:[%s1183] sm:$0xf]
        %1185 = vrot.lane.b32.xlu0 %v559, 72
        %v1186 = vpop.permute.xlu0 %1185
        %1187 = vrot.lane.b32.xlu0 %v564, 72
        %v1188 = vpop.permute.xlu0 %1187
        %1189 = vrot.lane.b32.xlu0 %v569, 72
        %v1190 = vpop.permute.xlu0 %1189
        %1191 = vrot.lane.b32.xlu0 %v574, 72
        %v1192 = vpop.permute.xlu0 %1191
        %v1198 = vsel %vm596, %v1184, 0
        %1200 = vmatprep.subr.mxu0 0.0
        %1201 = vmatpush1.msra.mxu0 0.0
        %1202 = vmatprep.subr.mxu0 0.0
        %1203 = vmatpush1.msra.mxu0 0.0
        %1204 = vmatprep.subr.mxu0 0.0
        %1205 = vmatpush1.msra.mxu0 0.0
        %1206 = vmatprep.subr.mxu0 0.0
        %1207 = vmatpush1.msra.mxu0 0.0
        %1208 = vmatprep.subr.mxu0 0.0
        %1209 = vmatpush1.msra.mxu0 0.0
        %1210 = vmatprep.subr.mxu0 0.0
        %1211 = vmatpush1.msra.mxu0 0.0
        %1212 = vmatprep.subr.mxu0 0.0
        %1213 = vmatpush1.msra.mxu0 0.0
        %1214 = vmatprep.subr.mxu0 0.0
        %1215 = vmatpush1.msra.mxu0 0.0
        %1216 = vmatprep.subr.mxu0 0.0
        %1217 = vmatpush1.msra.mxu0 0.0
        %1218 = vmatprep.subr.mxu0 0.0
        %1219 = vmatpush1.msra.mxu0 0.0
        %1220 = vmatprep.subr.mxu0 0.0
        %1221 = vmatpush1.msra.mxu0 0.0
        %1222 = vmatprep.subr.mxu0 0.0
        %1223 = vmatpush1.msra.mxu0 0.0
        %1224 = vmatprep.subr.mxu0 0.0
        %1225 = vmatpush1.msra.mxu0 %v1192
        %1226 = vmatprep.subr.mxu0 0.0
        %1227 = vmatpush1.msra.mxu0 %v1190
        %1228 = vmatprep.subr.mxu0 0.0
        %1229 = vmatpush1.msra.mxu0 %v1188
        %1230 = vmatprep.subr.mxu0 0.0
        %1231 = vmatpush1.msra.mxu0 %v1186
        %1232 = vmatprep.subr.mxu0 0.0
        %1233 = vmatpush2.msra.mxu0 0.0
        %1234 = vmatprep.subr.mxu0 0.0
        %1235 = vmatpush2.msra.mxu0 0.0
        %1236 = vmatprep.subr.mxu0 0.0
        %1237 = vmatpush2.msra.mxu0 0.0
        %1238 = vmatprep.subr.mxu0 0.0
        %1239 = vmatpush2.msra.mxu0 0.0
        %1240 = vmatprep.subr.mxu0 0.0
        %1241 = vmatpush2.msra.mxu0 0.0
        %1242 = vmatprep.subr.mxu0 0.0
        %1243 = vmatpush2.msra.mxu0 0.0
        %1244 = vmatprep.subr.mxu0 0.0
        %1245 = vmatpush2.msra.mxu0 0.0
        %1246 = vmatprep.subr.mxu0 0.0
        %1247 = vmatpush2.msra.mxu0 0.0
        %1248 = vmatprep.subr.mxu0 0.0
        %1249 = vmatpush2.msra.mxu0 0.0
        %1250 = vmatprep.subr.mxu0 0.0
        %1251 = vmatpush2.msra.mxu0 0.0
        %1252 = vmatprep.subr.mxu0 0.0
        %1253 = vmatpush2.msra.mxu0 0.0
        %1254 = vmatprep.subr.mxu0 0.0
        %1255 = vmatpush2.msra.mxu0 0.0
        %1256 = vmatprep.subr.mxu0 0.0
        %1257 = vmatpush2.msra.mxu0 0.0
        %1258 = vmatprep.subr.mxu0 0.0
        %1259 = vmatpush2.msra.mxu0 0.0
        %1260 = vmatprep.subr.mxu0 0.0
        %1261 = vmatpush2.msra.mxu0 0.0
        %1262 = vmatprep.subr.mxu0 0.0
        %1263 = vmatpush2.msra.mxu0 0.0
        %1264 = vmatprep.mubr.f32.mxu0 0.0
        %1265 = vmatmul.mubr.f32.gmra.mxu0 %v1198
        %v1266 = vpop.f32.mrf.mxu0
        %v1267 = vadd.f32 0.0, %v1266
        %v1268 = vpop.f32.mrf.mxu0
        %1269 = vdwg.mxu0
        %v1270 = vadd.f32 %v1182, %v1267
        %v1271 = vld [vmem:[%s7] sm:$0x1]
        %v1273 = vlaneseq
        %v1274 = vshrl.u32 %v1273, 7
        %v1275 = vsub.s32 0, %v1274
        %v1276 = vrot.slane %v1271, %v1275
        %v1278 = vadd.f32 %v1270, %v1276
        %v1279 = vld [vmem:[%s8] sm:$0xff]
        %v1280 = vld [vmem:[%s8 + $0x8] sm:$0xff]
        %vm1281 = vcmask 64512
        %v1283 = vsel %vm1281, %v1278, 0
        %1285 = vmatprep.subr.mxu0 0.0
        %1286 = vmatpush1.msra.mxu0 0.0
        %1287 = vmatprep.subr.mxu0 0.0
        %1288 = vmatpush1.msra.mxu0 0.0
        %1289 = vmatprep.subr.mxu0 0.0
        %1290 = vmatpush1.msra.mxu0 0.0
        %1291 = vmatprep.subr.mxu0 0.0
        %1292 = vmatpush1.msra.mxu0 0.0
        %1293 = vmatprep.subr.mxu0 0.0
        %1294 = vmatpush1.msra.mxu0 0.0
        %1295 = vmatprep.subr.mxu0 0.0
        %1296 = vmatpush1.msra.mxu0 0.0
        %1297 = vmatprep.subr.mxu0 0.0
        %1298 = vmatpush1.msra.mxu0 0.0
        %1299 = vmatprep.subr.mxu0 0.0
        %1300 = vmatpush1.msra.mxu0 0.0
        %1301 = vmatprep.subr.mxu0 0.0
        %1302 = vmatpush1.msra.mxu0 0.0
        %1303 = vmatprep.subr.mxu0 0.0
        %1304 = vmatpush1.msra.mxu0 0.0
        %1305 = vmatprep.subr.mxu0 0.0
        %1306 = vmatpush1.msra.mxu0 0.0
        %1307 = vmatprep.subr.mxu0 0.0
        %1308 = vmatpush1.msra.mxu0 0.0
        %1309 = vmatprep.subr.mxu0 0.0
        %1310 = vmatpush1.msra.mxu0 0.0
        %1311 = vmatprep.subr.mxu0 0.0
        %1312 = vmatpush1.msra.mxu0 0.0
        %1313 = vmatprep.subr.mxu0 0.0
        %1314 = vmatpush1.msra.mxu0 0.0
        %1315 = vmatprep.subr.mxu0 %v1280
        %1316 = vmatpush1.msra.mxu0 %v1279
        %1317 = vmatprep.subr.mxu0 0.0
        %1318 = vmatpush2.msra.mxu0 0.0
        %1319 = vmatprep.subr.mxu0 0.0
        %1320 = vmatpush2.msra.mxu0 0.0
        %1321 = vmatprep.subr.mxu0 0.0
        %1322 = vmatpush2.msra.mxu0 0.0
        %1323 = vmatprep.subr.mxu0 0.0
        %1324 = vmatpush2.msra.mxu0 0.0
        %1325 = vmatprep.subr.mxu0 0.0
        %1326 = vmatpush2.msra.mxu0 0.0
        %1327 = vmatprep.subr.mxu0 0.0
        %1328 = vmatpush2.msra.mxu0 0.0
        %1329 = vmatprep.subr.mxu0 0.0
        %1330 = vmatpush2.msra.mxu0 0.0
        %1331 = vmatprep.subr.mxu0 0.0
        %1332 = vmatpush2.msra.mxu0 0.0
        %1333 = vmatprep.subr.mxu0 0.0
        %1334 = vmatpush2.msra.mxu0 0.0
        %1335 = vmatprep.subr.mxu0 0.0
        %1336 = vmatpush2.msra.mxu0 0.0
        %1337 = vmatprep.subr.mxu0 0.0
        %1338 = vmatpush2.msra.mxu0 0.0
        %1339 = vmatprep.subr.mxu0 0.0
        %1340 = vmatpush2.msra.mxu0 0.0
        %1341 = vmatprep.subr.mxu0 0.0
        %1342 = vmatpush2.msra.mxu0 0.0
        %1343 = vmatprep.subr.mxu0 0.0
        %1344 = vmatpush2.msra.mxu0 0.0
        %1345 = vmatprep.subr.mxu0 0.0
        %1346 = vmatpush2.msra.mxu0 0.0
        %1347 = vmatprep.subr.mxu0 0.0
        %1348 = vmatpush2.msra.mxu0 0.0
        %1349 = vmatprep.mubr.f32.mxu0 0.0
        %1350 = vmatmul.mubr.f32.gmra.mxu0 %v1283
        %v1351 = vpop.f32.mrf.mxu0
        %v1352 = vadd.f32 0.0, %v1351
        %v1353 = vpop.f32.mrf.mxu0
        %v1354 = vadd.f32 0.0, %v1353
        %1355 = vdwg.mxu0
        %v1356 = vld [vmem:[%s9] sm:$0xff]
        %v1357 = vld [vmem:[%s9 + $0x8] sm:$0xff]
        %v1358 = vld [vmem:[%s9 + $0x10] sm:$0xff]
        %v1359 = vld [vmem:[%s9 + $0x18] sm:$0xff]
        %v1360 = vld [vmem:[%s9 + $0x20] sm:$0xff]
        %v1361 = vld [vmem:[%s9 + $0x28] sm:$0xff]
        %v1362 = vld [vmem:[%s9 + $0x30] sm:$0xff]
        %v1363 = vld [vmem:[%s9 + $0x38] sm:$0xff]
        %v1364 = vld [vmem:[%s9 + $0x40] sm:$0xff]
        %v1365 = vld [vmem:[%s9 + $0x48] sm:$0xff]
        %v1366 = vld [vmem:[%s9 + $0x50] sm:$0xff]
        %v1367 = vld [vmem:[%s9 + $0x58] sm:$0xff]
        %v1368 = vld [vmem:[%s9 + $0x60] sm:$0xff]
        %v1369 = vld [vmem:[%s9 + $0x68] sm:$0xff]
        %v1370 = vld [vmem:[%s9 + $0x70] sm:$0xff]
        %v1371 = vld [vmem:[%s9 + $0x78] sm:$0xff]
        %vm1372 = vcmask 31744
        %v1374 = vsel %vm1372, %v1356, 0
        %v1377 = vsel %vm1372, %v1357, 0
        %v1380 = vsel %vm1372, %v1358, 0
        %v1383 = vsel %vm1372, %v1359, 0
        %v1386 = vsel %vm1372, %v1360, 0
        %v1389 = vsel %vm1372, %v1361, 0
        %v1392 = vsel %vm1372, %v1362, 0
        %v1395 = vsel %vm1372, %v1363, 0
        %v1398 = vsel %vm1372, %v1364, 0
        %v1401 = vsel %vm1372, %v1365, 0
        %v1404 = vsel %vm1372, %v1366, 0
        %v1407 = vsel %vm1372, %v1367, 0
        %v1410 = vsel %vm1372, %v1368, 0
        %v1413 = vsel %vm1372, %v1369, 0
        %v1416 = vsel %vm1372, %v1370, 0
        %v1419 = vsel %vm1372, %v1371, 0
        %vm1421 = vcmask 1043456
        %v1423 = vsel %vm1421, %v1352, 0
        %v1426 = vsel %vm1421, %v1354, 0
        %1428 = vmatprep.subr.mxu0 0.0
        %1429 = vmatpush1.msra.mxu0 0.0
        %1430 = vmatprep.subr.mxu0 0.0
        %1431 = vmatpush1.msra.mxu0 0.0
        %1432 = vmatprep.subr.mxu0 0.0
        %1433 = vmatpush1.msra.mxu0 0.0
        %1434 = vmatprep.subr.mxu0 0.0
        %1435 = vmatpush1.msra.mxu0 0.0
        %1436 = vmatprep.subr.mxu0 0.0
        %1437 = vmatpush1.msra.mxu0 0.0
        %1438 = vmatprep.subr.mxu0 0.0
        %1439 = vmatpush1.msra.mxu0 0.0
        %1440 = vmatprep.subr.mxu0 0.0
        %1441 = vmatpush1.msra.mxu0 0.0
        %1442 = vmatprep.subr.mxu0 0.0
        %1443 = vmatpush1.msra.mxu0 0.0
        %1444 = vmatprep.subr.mxu0 0.0
        %1445 = vmatpush1.msra.mxu0 0.0
        %1446 = vmatprep.subr.mxu0 0.0
        %1447 = vmatpush1.msra.mxu0 0.0
        %1448 = vmatprep.subr.mxu0 0.0
        %1449 = vmatpush1.msra.mxu0 0.0
        %1450 = vmatprep.subr.mxu0 0.0
        %1451 = vmatpush1.msra.mxu0 0.0
        %1452 = vmatprep.subr.mxu0 0.0
        %1453 = vmatpush1.msra.mxu0 0.0
        %1454 = vmatprep.subr.mxu0 0.0
        %1455 = vmatpush1.msra.mxu0 0.0
        %1456 = vmatprep.subr.mxu0 0.0
        %1457 = vmatpush1.msra.mxu0 0.0
        %1458 = vmatprep.subr.mxu0 %v1426
        %1459 = vmatpush1.msra.mxu0 %v1423
        %1460 = vmatprep.subr.mxu0 0.0
        %1461 = vmatpush2.msra.mxu0 0.0
        %1462 = vmatprep.subr.mxu0 0.0
        %1463 = vmatpush2.msra.mxu0 0.0
        %1464 = vmatprep.subr.mxu0 0.0
        %1465 = vmatpush2.msra.mxu0 0.0
        %1466 = vmatprep.subr.mxu0 0.0
        %1467 = vmatpush2.msra.mxu0 0.0
        %1468 = vmatprep.subr.mxu0 0.0
        %1469 = vmatpush2.msra.mxu0 0.0
        %1470 = vmatprep.subr.mxu0 0.0
        %1471 = vmatpush2.msra.mxu0 0.0
        %1472 = vmatprep.subr.mxu0 0.0
        %1473 = vmatpush2.msra.mxu0 0.0
        %1474 = vmatprep.subr.mxu0 0.0
        %1475 = vmatpush2.msra.mxu0 0.0
        %1476 = vmatprep.subr.mxu0 0.0
        %1477 = vmatpush2.msra.mxu0 0.0
        %1478 = vmatprep.subr.mxu0 0.0
        %1479 = vmatpush2.msra.mxu0 0.0
        %1480 = vmatprep.subr.mxu0 0.0
        %1481 = vmatpush2.msra.mxu0 0.0
        %1482 = vmatprep.subr.mxu0 0.0
        %1483 = vmatpush2.msra.mxu0 0.0
        %1484 = vmatprep.subr.mxu0 0.0
        %1485 = vmatpush2.msra.mxu0 0.0
        %1486 = vmatprep.subr.mxu0 0.0
        %1487 = vmatpush2.msra.mxu0 0.0
        %1488 = vmatprep.subr.mxu0 0.0
        %1489 = vmatpush2.msra.mxu0 0.0
        %1490 = vmatprep.subr.mxu0 0.0
        %1491 = vmatpush2.msra.mxu0 0.0
        %1492 = vmatprep.mubr.f32.mxu0 0.0
        %1493 = vmatmul.mubr.f32.gmra.mxu0 %v1374
        %v1494 = vpop.f32.mrf.mxu0
        %v1495 = vadd.f32 0.0, %v1494
        %v1496 = vpop.f32.mrf.mxu0
        %v1497 = vadd.f32 0.0, %v1496
        %1498 = vmatprep.mubr.f32.mxu0 0.0
        %1499 = vmatmul.mubr.f32.gmra.mxu0 %v1377
        %v1500 = vpop.f32.mrf.mxu0
        %v1501 = vadd.f32 0.0, %v1500
        %v1502 = vpop.f32.mrf.mxu0
        %v1503 = vadd.f32 0.0, %v1502
        %1504 = vmatprep.mubr.f32.mxu0 0.0
        %1505 = vmatmul.mubr.f32.gmra.mxu0 %v1380
        %v1506 = vpop.f32.mrf.mxu0
        %v1507 = vadd.f32 0.0, %v1506
        %v1508 = vpop.f32.mrf.mxu0
        %v1509 = vadd.f32 0.0, %v1508
        %1510 = vmatprep.mubr.f32.mxu0 0.0
        %1511 = vmatmul.mubr.f32.gmra.mxu0 %v1383
        %v1512 = vpop.f32.mrf.mxu0
        %v1513 = vadd.f32 0.0, %v1512
        %v1514 = vpop.f32.mrf.mxu0
        %v1515 = vadd.f32 0.0, %v1514
        %1516 = vmatprep.mubr.f32.mxu0 0.0
        %1517 = vmatmul.mubr.f32.gmra.mxu0 %v1386
        %v1518 = vpop.f32.mrf.mxu0
        %v1519 = vadd.f32 0.0, %v1518
        %v1520 = vpop.f32.mrf.mxu0
        %v1521 = vadd.f32 0.0, %v1520
        %1522 = vmatprep.mubr.f32.mxu0 0.0
        %1523 = vmatmul.mubr.f32.gmra.mxu0 %v1389
        %v1524 = vpop.f32.mrf.mxu0
        %v1525 = vadd.f32 0.0, %v1524
        %v1526 = vpop.f32.mrf.mxu0
        %v1527 = vadd.f32 0.0, %v1526
        %1528 = vmatprep.mubr.f32.mxu0 0.0
        %1529 = vmatmul.mubr.f32.gmra.mxu0 %v1392
        %v1530 = vpop.f32.mrf.mxu0
        %v1531 = vadd.f32 0.0, %v1530
        %v1532 = vpop.f32.mrf.mxu0
        %v1533 = vadd.f32 0.0, %v1532
        %1534 = vmatprep.mubr.f32.mxu0 0.0
        %1535 = vmatmul.mubr.f32.gmra.mxu0 %v1395
        %v1536 = vpop.f32.mrf.mxu0
        %v1537 = vadd.f32 0.0, %v1536
        %v1538 = vpop.f32.mrf.mxu0
        %v1539 = vadd.f32 0.0, %v1538
        %1540 = vmatprep.mubr.f32.mxu0 0.0
        %1541 = vmatmul.mubr.f32.gmra.mxu0 %v1398
        %v1542 = vpop.f32.mrf.mxu0
        %v1543 = vadd.f32 0.0, %v1542
        %v1544 = vpop.f32.mrf.mxu0
        %v1545 = vadd.f32 0.0, %v1544
        %1546 = vmatprep.mubr.f32.mxu0 0.0
        %1547 = vmatmul.mubr.f32.gmra.mxu0 %v1401
        %v1548 = vpop.f32.mrf.mxu0
        %v1549 = vadd.f32 0.0, %v1548
        %v1550 = vpop.f32.mrf.mxu0
        %v1551 = vadd.f32 0.0, %v1550
        %1552 = vmatprep.mubr.f32.mxu0 0.0
        %1553 = vmatmul.mubr.f32.gmra.mxu0 %v1404
        %v1554 = vpop.f32.mrf.mxu0
        %v1555 = vadd.f32 0.0, %v1554
        %v1556 = vpop.f32.mrf.mxu0
        %v1557 = vadd.f32 0.0, %v1556
        %1558 = vmatprep.mubr.f32.mxu0 0.0
        %1559 = vmatmul.mubr.f32.gmra.mxu0 %v1407
        %v1560 = vpop.f32.mrf.mxu0
        %v1561 = vadd.f32 0.0, %v1560
        %v1562 = vpop.f32.mrf.mxu0
        %v1563 = vadd.f32 0.0, %v1562
        %1564 = vmatprep.mubr.f32.mxu0 0.0
        %1565 = vmatmul.mubr.f32.gmra.mxu0 %v1410
        %v1566 = vpop.f32.mrf.mxu0
        %v1567 = vadd.f32 0.0, %v1566
        %v1568 = vpop.f32.mrf.mxu0
        %v1569 = vadd.f32 0.0, %v1568
        %1570 = vmatprep.mubr.f32.mxu0 0.0
        %1571 = vmatmul.mubr.f32.gmra.mxu0 %v1413
        %v1572 = vpop.f32.mrf.mxu0
        %v1573 = vadd.f32 0.0, %v1572
        %v1574 = vpop.f32.mrf.mxu0
        %v1575 = vadd.f32 0.0, %v1574
        %1576 = vmatprep.mubr.f32.mxu0 0.0
        %1577 = vmatmul.mubr.f32.gmra.mxu0 %v1416
        %v1578 = vpop.f32.mrf.mxu0
        %v1579 = vadd.f32 0.0, %v1578
        %v1580 = vpop.f32.mrf.mxu0
        %v1581 = vadd.f32 0.0, %v1580
        %1582 = vmatprep.mubr.f32.mxu0 0.0
        %1583 = vmatmul.mubr.f32.gmra.mxu0 %v1419
        %v1584 = vpop.f32.mrf.mxu0
        %v1585 = vadd.f32 0.0, %v1584
        %v1586 = vpop.f32.mrf.mxu0
        %v1587 = vadd.f32 0.0, %v1586
        %1588 = vdwg.mxu0
        %1589 = vst [vmem:[%s335] sm:$0xff] %v1495
        %1590 = vst [vmem:[%s335 + $0x8] sm:$0xff] %v1501
        %1591 = vst [vmem:[%s335 + $0x10] sm:$0xff] %v1507
        %1592 = vst [vmem:[%s335 + $0x18] sm:$0xff] %v1513
        %1593 = vst [vmem:[%s335 + $0x20] sm:$0xff] %v1519
        %1594 = vst [vmem:[%s335 + $0x28] sm:$0xff] %v1525
        %1595 = vst [vmem:[%s335 + $0x30] sm:$0xff] %v1531
        %1596 = vst [vmem:[%s335 + $0x38] sm:$0xff] %v1537
        %1597 = vst [vmem:[%s335 + $0x40] sm:$0xff] %v1543
        %1598 = vst [vmem:[%s335 + $0x48] sm:$0xff] %v1549
        %1599 = vst [vmem:[%s335 + $0x50] sm:$0xff] %v1555
        %1600 = vst [vmem:[%s335 + $0x58] sm:$0xff] %v1561
        %1601 = vst [vmem:[%s335 + $0x60] sm:$0xff] %v1567
        %1602 = vst [vmem:[%s335 + $0x68] sm:$0xff] %v1573
        %1603 = vst [vmem:[%s335 + $0x70] sm:$0xff] %v1579
        %1604 = vst [vmem:[%s335 + $0x78] sm:$0xff] %v1585
        %s1605 = scalar_lea.vmem %s335, 128 [#allocation5]
        %1606 = vst [vmem:[%s1605] sm:$0xff] %v1497
        %1607 = vst [vmem:[%s1605 + $0x8] sm:$0xff] %v1503
        %1608 = vst [vmem:[%s1605 + $0x10] sm:$0xff] %v1509
        %1609 = vst [vmem:[%s1605 + $0x18] sm:$0xff] %v1515
        %1610 = vst [vmem:[%s1605 + $0x20] sm:$0xff] %v1521
        %1611 = vst [vmem:[%s1605 + $0x28] sm:$0xff] %v1527
        %1612 = vst [vmem:[%s1605 + $0x30] sm:$0xff] %v1533
        %1613 = vst [vmem:[%s1605 + $0x38] sm:$0xff] %v1539
        %1614 = vst [vmem:[%s1605 + $0x40] sm:$0xff] %v1545
        %1615 = vst [vmem:[%s1605 + $0x48] sm:$0xff] %v1551
        %1616 = vst [vmem:[%s1605 + $0x50] sm:$0xff] %v1557
        %1617 = vst [vmem:[%s1605 + $0x58] sm:$0xff] %v1563
        %1618 = vst [vmem:[%s1605 + $0x60] sm:$0xff] %v1569
        %1619 = vst [vmem:[%s1605 + $0x68] sm:$0xff] %v1575
        %1620 = vst [vmem:[%s1605 + $0x70] sm:$0xff] %v1581
        %1621 = vst [vmem:[%s1605 + $0x78] sm:$0xff] %v1587
        %s1622 = sand.u32 %s224, 1
        %s1623 = scalar_lea.sflag [#allocation6], %s1622
        %s1624 = sand.u32 %s224, 1
        %s1625 = smul.addr %s1624, 256
        %s1626 = scalar_lea.vmem [#allocation5], %s1625
        // Predicated region
        $region53: #{flow_extract_forward.1} parent=51 // pred_check
          %p1627 = pneg %p234
        $region54: #{flow_extract_forward.1} parent=51 // pred_check_branch
          %1629 = sbr.rel (%p1627) target = $region56
        $region55: #{flow_extract_forward.1} parent=51 // pred_region
          %s1631 = ssub.s32 4096, 4096
          %1632 = vsyncadd %s1623, %s1631
          %s1633 = smul.addr %s34, 32
          %s1634 = smul.addr %s1633, 128
          %s1635 = scalar_lea.hbm %s10, %s1634
          %s1636 = sshll.u32 %s1626, 4
          %s1637 = int_to_ptr.vmem [resolvable:$true] %s1636
          %1642 = dma.vmem_to_hbm [thread:$0]  %s1637, 4096, %s1635, %s1623, 128, 128, 8
        $region56: #{flow_extract_forward.1} parent=51 // pred_fallthru
          _
      $region52: #{flow_extract_forward.1} parent=5 // pred_fallthru
        _
      %p1643 = scmp.le.s32.totalorder 2, %s29
      // Predicated region
      $region57: #{flow_extract_forward.1} parent=5 // pred_check
        %p1644 = pneg %p1643
      $region58: #{flow_extract_forward.1} parent=5 // pred_check_branch
        %1646 = sbr.rel (%p1644) target = $region60
      $region59: #{flow_extract_forward.1} parent=5 // pred_region
        %s1647 = ssub.s32 %s29, 2
        // Predicated region
        $region61: #{flow_extract_forward.1} parent=59 // pred_check
          %p1648 = pneg %p240
        $region62: #{flow_extract_forward.1} parent=59 // pred_check_branch
          %1650 = sbr.rel (%p1648) target = $region64
        $region63: #{flow_extract_forward.1} parent=59 // pred_region
          %s1651 = sand.u32 %s225, 1
          %s1652 = scalar_lea.sflag [#allocation6], %s1651
          %s1653 = sand.u32 %s225, 1
          %s1654 = smul.addr %s1653, 256
          %s1655 = scalar_lea.vmem [#allocation5], %s1654
          %1656 = dma.done %s1652, 4096
        $region64: #{flow_extract_forward.1} parent=59 // pred_fallthru
          _
      $region60: #{flow_extract_forward.1} parent=5 // pred_fallthru
        _
    $region6: #{flow_extract_forward.1} parent=1 // loop_footer
      %s33 = sadd.s32 1, %s29
    $region7: #{flow_extract_forward.1} parent=1 // loop_footer_branch
      %28 = sbr.rel target = $region3
    $region8: #{flow_extract_forward.1} parent=1 // loop_exit
      _
    %1657 = vsyncpa [#allocation6], 1
    %s1658 = scalar_lea.sflag [#allocation6], 1
    %1659 = vsyncpa %s1658, 1

</llo_original>
